<compile_context>
chip_gen: v7x
topology: tpu7x:2x2x1
jax: 0.10.0
libtpu: 0.0.40
codegen_flags: <defaults>
</compile_context>

<pallas_src>
import math

import jax
import jax.numpy as jnp
from jax.experimental import pallas as pl
from jax.experimental.pallas import tpu as pltpu

# ----------------------------- configuration --------------------------------
HIDDEN = 32          # config.hidden_size
NUM_HEADS = 4        # config.transformer['num_heads']
HEAD_DIM = HIDDEN // NUM_HEADS
BATCH = 2
SEQ = 16             # sublane-aligned sequence length
M_ROWS = BATCH * SEQ # 32


# ------------------------------- kernel --------------------------------------
def _make_attention_kernel(B, S, H, NH):
    HD = H // NH
    M = B * S

    def _attention_kernel(x_ref, wqkv_ref, bqkv_ref, wo_ref, bo_ref, o_ref):
        # x_ref: (B*S, H) — batch folded into the sublane/M dimension.
        x = x_ref[...]

        # Fused QKV projection: one (M, H) @ (H, 3H) MXU matmul.
        # The 1/sqrt(head_dim) scale is pre-folded into the query columns.
        qkv = jnp.dot(x, wqkv_ref[...],
                      preferred_element_type=jnp.float32) + bqkv_ref[...]
        qkv3 = qkv.reshape(B, S, 3 * H)          # split leading dim only (safe)

        wo = wo_ref[...]                          # (H, H), loaded once
        acc = jnp.zeros((M, H), jnp.float32)

        for h in range(NH):                       # statically unrolled, NH = 4
            qh = qkv3[:, :, h * HD:(h + 1) * HD]              # (B, S, HD)
            kh = qkv3[:, :, H + h * HD:H + (h + 1) * HD]      # (B, S, HD)
            vh = qkv3[:, :, 2 * H + h * HD:2 * H + (h + 1) * HD]

            # scores (already scaled via Wq): (B, S, S)
            s = jnp.einsum('bqd,bkd->bqk', qh, kh,
                           preferred_element_type=jnp.float32)
            s = s - jnp.max(s, axis=-1, keepdims=True)
            e = jnp.exp(s)
            probs = e / jnp.sum(e, axis=-1, keepdims=True)
            # attn_dropout: eval-mode identity.

            ctx = jnp.einsum('bqk,bkd->bqd', probs, vh,
                             preferred_element_type=jnp.float32)   # (B, S, HD)

            # Concat-free head merge: concat(ctx_h) @ Wo == sum_h ctx_h @ Wo_rows_h
            acc = acc + jnp.dot(ctx.reshape(M, HD),
                                wo[h * HD:(h + 1) * HD, :],
                                preferred_element_type=jnp.float32)

        # proj_dropout: eval-mode identity.
        o_ref[...] = (acc + bo_ref[...]).astype(o_ref.dtype)

    return _attention_kernel


# ------------------------------- wrapper --------------------------------------
def attention_forward(hidden_states, params):
    """Equivalent of Attention.forward(hidden_states) with vis=False."""
    B, S, H = hidden_states.shape
    M = B * S
    x2d = hidden_states.reshape(M, H)            # lane-dense (M, H) activation slab

    out2d = pl.pallas_call(
        _make_attention_kernel(B, S, H, NUM_HEADS),
        out_shape=jax.ShapeDtypeStruct((M, H), jnp.float32),
        grid=(1,),
        in_specs=[
            pl.BlockSpec((M, H), lambda i: (0, 0)),        # hidden_states
            pl.BlockSpec((H, 3 * H), lambda i: (0, 0)),    # fused Wqkv (scale folded)
            pl.BlockSpec((1, 3 * H), lambda i: (0, 0)),    # fused bqkv
            pl.BlockSpec((H, H), lambda i: (0, 0)),        # Wo
            pl.BlockSpec((1, H), lambda i: (0, 0)),        # bo
        ],
        out_specs=pl.BlockSpec((M, H), lambda i: (0, 0)),
        compiler_params=pltpu.CompilerParams(
            dimension_semantics=("arbitrary",)),
    )(x2d, params["wqkv"], params["bqkv"], params["wo"], params["bo"])

    attention_output = out2d.reshape(B, S, H)
    weights = None                               # vis=False
    return attention_output, weights


# --------------------------- pure-JAX reference ------------------------------
def reference_forward(hidden_states, p):
    B, S, H = hidden_states.shape
    q = hidden_states @ p["wq"] + p["bq"]
    k = hidden_states @ p["wk"] + p["bk"]
    v = hidden_states @ p["wv"] + p["bv"]

    def split(t):
        return t.reshape(B, S, NUM_HEADS, HEAD_DIM).transpose(0, 2, 1, 3)

    qh, kh, vh = split(q), split(k), split(v)
    s = jnp.einsum('bhqd,bhkd->bhqk', qh, kh) / math.sqrt(HEAD_DIM)
    probs = jax.nn.softmax(s, axis=-1)
    ctx = jnp.einsum('bhqk,bhkd->bhqd', probs, vh)
    ctx = ctx.transpose(0, 2, 1, 3).reshape(B, S, H)
    return ctx @ p["wo"] + p["bo"]


# ------------------------------ parameter init --------------------------------
def init_params(key):
    def nrm(k, shape, scale=0.05):
        return (scale * jax.random.normal(k, shape)).astype(jnp.float32)

    ks = jax.random.split(key, 8)
    wq, bq = nrm(ks[0], (HIDDEN, HIDDEN)), nrm(ks[1], (1, HIDDEN), 0.02)
    wk, bk = nrm(ks[2], (HIDDEN, HIDDEN)), nrm(ks[3], (1, HIDDEN), 0.02)
    wv, bv = nrm(ks[4], (HIDDEN, HIDDEN)), nrm(ks[5], (1, HIDDEN), 0.02)
    wo, bo = nrm(ks[6], (HIDDEN, HIDDEN)), nrm(ks[7], (1, HIDDEN), 0.02)

    # Fold the 1/sqrt(head_dim) attention scale into Wq/bq and fuse QKV,
    # once, at init time (not per call, not in the kernel).
    scale = 1.0 / math.sqrt(HEAD_DIM)
    wqkv = jnp.concatenate([wq * scale, wk, wv], axis=1)      # (H, 3H)
    bqkv = jnp.concatenate([bq * scale, bk, bv], axis=1)      # (1, 3H)

    return {"wq": wq, "bq": bq, "wk": wk, "bk": bk, "wv": wv, "bv": bv,
            "wo": wo, "bo": bo, "wqkv": wqkv, "bqkv": bqkv}


# ---------------------------------- main --------------------------------------
if __name__ == "__main__":
    key = jax.random.PRNGKey(0)
    pkey, xkey = jax.random.split(key)
    params = init_params(pkey)
    hidden_states = jax.random.normal(xkey, (BATCH, SEQ, HIDDEN),
                                      dtype=jnp.float32)

    out, weights = attention_forward(hidden_states, params)
    out = jax.block_until_ready(out)

    ref = jax.block_until_ready(reference_forward(hidden_states, params))
    max_diff = float(jnp.max(jnp.abs(out - ref)))
    assert out.shape == (BATCH, SEQ, HIDDEN), out.shape
    assert weights is None
    assert max_diff < 1e-3, f"max abs diff vs reference: {max_diff}"

    print("KERNEL_OK")
</pallas_src>

<mosaic_0001>
module attributes {stable_mosaic.version = 11 : i64} {
  func.func @_attention_kernel(%arg0: i32, %arg1: memref<32x32xf32, #tpu.memory_space<vmem>>, %arg2: memref<32x96xf32, #tpu.memory_space<vmem>>, %arg3: memref<1x96xf32, #tpu.memory_space<vmem>>, %arg4: memref<32x32xf32, #tpu.memory_space<vmem>>, %arg5: memref<1x32xf32, #tpu.memory_space<vmem>>, %arg6: memref<32x32xf32, #tpu.memory_space<vmem>>) attributes {dimension_semantics = [#tpu.dimension_semantics<arbitrary>], iteration_bounds = array<i64: 1>, scalar_prefetch = 0 : i64, scratch_operands = 0 : i64, tpu.core_type = #tpu.core_type<tc>, window_params = [{pipeline_mode = #tpu.pipeline_mode<synchronous>, transform_indices = @transform_0, window_bounds = array<i64: 32, 32>}, {pipeline_mode = #tpu.pipeline_mode<synchronous>, transform_indices = @transform_1, window_bounds = array<i64: 32, 96>}, {pipeline_mode = #tpu.pipeline_mode<synchronous>, transform_indices = @transform_2, window_bounds = array<i64: 1, 96>}, {pipeline_mode = #tpu.pipeline_mode<synchronous>, transform_indices = @transform_3, window_bounds = array<i64: 32, 32>}, {pipeline_mode = #tpu.pipeline_mode<synchronous>, transform_indices = @transform_4, window_bounds = array<i64: 1, 32>}, {pipeline_mode = #tpu.pipeline_mode<synchronous>, transform_indices = @transform_5, window_bounds = array<i64: 32, 32>}]} {
    %c0 = arith.constant 0 : index
    %c0_0 = arith.constant 0 : index
    %0 = vector.load %arg1[%c0, %c0_0] : memref<32x32xf32, #tpu.memory_space<vmem>>, vector<32x32xf32>
    %c0_1 = arith.constant 0 : index
    %c0_2 = arith.constant 0 : index
    %1 = vector.load %arg2[%c0_1, %c0_2] : memref<32x96xf32, #tpu.memory_space<vmem>>, vector<32x96xf32>
    %cst = arith.constant dense<0.000000e+00> : vector<32x96xf32>
    %2 = tpu.matmul %0, %1, %cst {dimension_numbers = #tpu.dot_dimension_numbers<[1], [0], [0], [1], [0, 0, 1, 1], [], []>} : vector<32x32xf32>, vector<32x96xf32>, vector<32x96xf32> -> vector<32x96xf32>
    %c0_3 = arith.constant 0 : index
    %c0_4 = arith.constant 0 : index
    %3 = vector.load %arg3[%c0_3, %c0_4] : memref<1x96xf32, #tpu.memory_space<vmem>>, vector<1x96xf32>
    %4 = vector.broadcast %3 : vector<1x96xf32> to vector<32x96xf32>
    %5 = arith.addf %2, %4 : vector<32x96xf32>
    %6 = vector.shape_cast %5 : vector<32x96xf32> to vector<2x16x96xf32>
    %c0_5 = arith.constant 0 : index
    %c0_6 = arith.constant 0 : index
    %7 = vector.load %arg4[%c0_5, %c0_6] : memref<32x32xf32, #tpu.memory_space<vmem>>, vector<32x32xf32>
    %cst_7 = arith.constant 0.000000e+00 : f32
    %8 = vector.broadcast %cst_7 : f32 to vector<32x32xf32>
    %9 = vector.extract_strided_slice %6 {offsets = [0, 0, 0], sizes = [2, 16, 8], strides = [1, 1, 1]} : vector<2x16x96xf32> to vector<2x16x8xf32>
    %10 = vector.extract_strided_slice %6 {offsets = [0, 0, 32], sizes = [2, 16, 8], strides = [1, 1, 1]} : vector<2x16x96xf32> to vector<2x16x8xf32>
    %11 = vector.extract_strided_slice %6 {offsets = [0, 0, 64], sizes = [2, 16, 8], strides = [1, 1, 1]} : vector<2x16x96xf32> to vector<2x16x8xf32>
    "tpu.trace_start"() <{level = 10 : i32, message = "bqd,bkd->bqk"}> : () -> ()
    %cst_8 = arith.constant dense<0.000000e+00> : vector<2x16x16xf32>
    %12 = tpu.matmul %9, %10, %cst_8 {dimension_numbers = #tpu.dot_dimension_numbers<[2], [2], [1], [1], [0, 0, 0, 1, 1, 1], [0], [0]>} : vector<2x16x8xf32>, vector<2x16x8xf32>, vector<2x16x16xf32> -> vector<2x16x16xf32>
    "tpu.trace_stop"() : () -> ()
    %cst_9 = arith.constant dense<0xFF800000> : vector<2x16xf32>
    %13 = vector.multi_reduction <maximumf>, %12, %cst_9 [2] : vector<2x16x16xf32> to vector<2x16xf32>
    %14 = vector.shape_cast %13 : vector<2x16xf32> to vector<2x16x1xf32>
    %15 = vector.broadcast %14 : vector<2x16x1xf32> to vector<2x16x16xf32>
    %16 = arith.subf %12, %15 : vector<2x16x16xf32>
    %17 = math.exp %16 : vector<2x16x16xf32>
    %cst_10 = arith.constant dense<0.000000e+00> : vector<2x16xf32>
    %18 = vector.multi_reduction <add>, %17, %cst_10 [2] : vector<2x16x16xf32> to vector<2x16xf32>
    %19 = vector.shape_cast %18 : vector<2x16xf32> to vector<2x16x1xf32>
    %20 = vector.broadcast %19 : vector<2x16x1xf32> to vector<2x16x16xf32>
    %21 = arith.divf %17, %20 : vector<2x16x16xf32>
    "tpu.trace_start"() <{level = 10 : i32, message = "bqk,bkd->bqd"}> : () -> ()
    %cst_11 = arith.constant dense<0.000000e+00> : vector<2x16x8xf32>
    %22 = tpu.matmul %21, %11, %cst_11 {dimension_numbers = #tpu.dot_dimension_numbers<[2], [1], [1], [2], [0, 0, 0, 1, 1, 2], [0], [0]>} : vector<2x16x16xf32>, vector<2x16x8xf32>, vector<2x16x8xf32> -> vector<2x16x8xf32>
    "tpu.trace_stop"() : () -> ()
    %23 = vector.shape_cast %22 : vector<2x16x8xf32> to vector<32x8xf32>
    %24 = vector.extract_strided_slice %7 {offsets = [0, 0], sizes = [8, 32], strides = [1, 1]} : vector<32x32xf32> to vector<8x32xf32>
    %cst_12 = arith.constant dense<0.000000e+00> : vector<32x32xf32>
    %25 = tpu.matmul %23, %24, %cst_12 {dimension_numbers = #tpu.dot_dimension_numbers<[1], [0], [0], [1], [0, 0, 1, 1], [], []>} : vector<32x8xf32>, vector<8x32xf32>, vector<32x32xf32> -> vector<32x32xf32>
    %26 = arith.addf %8, %25 : vector<32x32xf32>
    %27 = vector.extract_strided_slice %6 {offsets = [0, 0, 8], sizes = [2, 16, 8], strides = [1, 1, 1]} : vector<2x16x96xf32> to vector<2x16x8xf32>
    %28 = vector.extract_strided_slice %6 {offsets = [0, 0, 40], sizes = [2, 16, 8], strides = [1, 1, 1]} : vector<2x16x96xf32> to vector<2x16x8xf32>
    %29 = vector.extract_strided_slice %6 {offsets = [0, 0, 72], sizes = [2, 16, 8], strides = [1, 1, 1]} : vector<2x16x96xf32> to vector<2x16x8xf32>
    "tpu.trace_start"() <{level = 10 : i32, message = "bqd,bkd->bqk"}> : () -> ()
    %cst_13 = arith.constant dense<0.000000e+00> : vector<2x16x16xf32>
    %30 = tpu.matmul %27, %28, %cst_13 {dimension_numbers = #tpu.dot_dimension_numbers<[2], [2], [1], [1], [0, 0, 0, 1, 1, 1], [0], [0]>} : vector<2x16x8xf32>, vector<2x16x8xf32>, vector<2x16x16xf32> -> vector<2x16x16xf32>
    "tpu.trace_stop"() : () -> ()
    %cst_14 = arith.constant dense<0xFF800000> : vector<2x16xf32>
    %31 = vector.multi_reduction <maximumf>, %30, %cst_14 [2] : vector<2x16x16xf32> to vector<2x16xf32>
    %32 = vector.shape_cast %31 : vector<2x16xf32> to vector<2x16x1xf32>
    %33 = vector.broadcast %32 : vector<2x16x1xf32> to vector<2x16x16xf32>
    %34 = arith.subf %30, %33 : vector<2x16x16xf32>
    %35 = math.exp %34 : vector<2x16x16xf32>
    %cst_15 = arith.constant dense<0.000000e+00> : vector<2x16xf32>
    %36 = vector.multi_reduction <add>, %35, %cst_15 [2] : vector<2x16x16xf32> to vector<2x16xf32>
    %37 = vector.shape_cast %36 : vector<2x16xf32> to vector<2x16x1xf32>
    %38 = vector.broadcast %37 : vector<2x16x1xf32> to vector<2x16x16xf32>
    %39 = arith.divf %35, %38 : vector<2x16x16xf32>
    "tpu.trace_start"() <{level = 10 : i32, message = "bqk,bkd->bqd"}> : () -> ()
    %cst_16 = arith.constant dense<0.000000e+00> : vector<2x16x8xf32>
    %40 = tpu.matmul %39, %29, %cst_16 {dimension_numbers = #tpu.dot_dimension_numbers<[2], [1], [1], [2], [0, 0, 0, 1, 1, 2], [0], [0]>} : vector<2x16x16xf32>, vector<2x16x8xf32>, vector<2x16x8xf32> -> vector<2x16x8xf32>
    "tpu.trace_stop"() : () -> ()
    %41 = vector.shape_cast %40 : vector<2x16x8xf32> to vector<32x8xf32>
    %42 = vector.extract_strided_slice %7 {offsets = [8, 0], sizes = [8, 32], strides = [1, 1]} : vector<32x32xf32> to vector<8x32xf32>
    %cst_17 = arith.constant dense<0.000000e+00> : vector<32x32xf32>
    %43 = tpu.matmul %41, %42, %cst_17 {dimension_numbers = #tpu.dot_dimension_numbers<[1], [0], [0], [1], [0, 0, 1, 1], [], []>} : vector<32x8xf32>, vector<8x32xf32>, vector<32x32xf32> -> vector<32x32xf32>
    %44 = arith.addf %26, %43 : vector<32x32xf32>
    %45 = vector.extract_strided_slice %6 {offsets = [0, 0, 16], sizes = [2, 16, 8], strides = [1, 1, 1]} : vector<2x16x96xf32> to vector<2x16x8xf32>
    %46 = vector.extract_strided_slice %6 {offsets = [0, 0, 48], sizes = [2, 16, 8], strides = [1, 1, 1]} : vector<2x16x96xf32> to vector<2x16x8xf32>
    %47 = vector.extract_strided_slice %6 {offsets = [0, 0, 80], sizes = [2, 16, 8], strides = [1, 1, 1]} : vector<2x16x96xf32> to vector<2x16x8xf32>
    "tpu.trace_start"() <{level = 10 : i32, message = "bqd,bkd->bqk"}> : () -> ()
    %cst_18 = arith.constant dense<0.000000e+00> : vector<2x16x16xf32>
    %48 = tpu.matmul %45, %46, %cst_18 {dimension_numbers = #tpu.dot_dimension_numbers<[2], [2], [1], [1], [0, 0, 0, 1, 1, 1], [0], [0]>} : vector<2x16x8xf32>, vector<2x16x8xf32>, vector<2x16x16xf32> -> vector<2x16x16xf32>
    "tpu.trace_stop"() : () -> ()
    %cst_19 = arith.constant dense<0xFF800000> : vector<2x16xf32>
    %49 = vector.multi_reduction <maximumf>, %48, %cst_19 [2] : vector<2x16x16xf32> to vector<2x16xf32>
    %50 = vector.shape_cast %49 : vector<2x16xf32> to vector<2x16x1xf32>
    %51 = vector.broadcast %50 : vector<2x16x1xf32> to vector<2x16x16xf32>
    %52 = arith.subf %48, %51 : vector<2x16x16xf32>
    %53 = math.exp %52 : vector<2x16x16xf32>
    %cst_20 = arith.constant dense<0.000000e+00> : vector<2x16xf32>
    %54 = vector.multi_reduction <add>, %53, %cst_20 [2] : vector<2x16x16xf32> to vector<2x16xf32>
    %55 = vector.shape_cast %54 : vector<2x16xf32> to vector<2x16x1xf32>
    %56 = vector.broadcast %55 : vector<2x16x1xf32> to vector<2x16x16xf32>
    %57 = arith.divf %53, %56 : vector<2x16x16xf32>
    "tpu.trace_start"() <{level = 10 : i32, message = "bqk,bkd->bqd"}> : () -> ()
    %cst_21 = arith.constant dense<0.000000e+00> : vector<2x16x8xf32>
    %58 = tpu.matmul %57, %47, %cst_21 {dimension_numbers = #tpu.dot_dimension_numbers<[2], [1], [1], [2], [0, 0, 0, 1, 1, 2], [0], [0]>} : vector<2x16x16xf32>, vector<2x16x8xf32>, vector<2x16x8xf32> -> vector<2x16x8xf32>
    "tpu.trace_stop"() : () -> ()
    %59 = vector.shape_cast %58 : vector<2x16x8xf32> to vector<32x8xf32>
    %60 = vector.extract_strided_slice %7 {offsets = [16, 0], sizes = [8, 32], strides = [1, 1]} : vector<32x32xf32> to vector<8x32xf32>
    %cst_22 = arith.constant dense<0.000000e+00> : vector<32x32xf32>
    %61 = tpu.matmul %59, %60, %cst_22 {dimension_numbers = #tpu.dot_dimension_numbers<[1], [0], [0], [1], [0, 0, 1, 1], [], []>} : vector<32x8xf32>, vector<8x32xf32>, vector<32x32xf32> -> vector<32x32xf32>
    %62 = arith.addf %44, %61 : vector<32x32xf32>
    %63 = vector.extract_strided_slice %6 {offsets = [0, 0, 24], sizes = [2, 16, 8], strides = [1, 1, 1]} : vector<2x16x96xf32> to vector<2x16x8xf32>
    %64 = vector.extract_strided_slice %6 {offsets = [0, 0, 56], sizes = [2, 16, 8], strides = [1, 1, 1]} : vector<2x16x96xf32> to vector<2x16x8xf32>
    %65 = vector.extract_strided_slice %6 {offsets = [0, 0, 88], sizes = [2, 16, 8], strides = [1, 1, 1]} : vector<2x16x96xf32> to vector<2x16x8xf32>
    "tpu.trace_start"() <{level = 10 : i32, message = "bqd,bkd->bqk"}> : () -> ()
    %cst_23 = arith.constant dense<0.000000e+00> : vector<2x16x16xf32>
    %66 = tpu.matmul %63, %64, %cst_23 {dimension_numbers = #tpu.dot_dimension_numbers<[2], [2], [1], [1], [0, 0, 0, 1, 1, 1], [0], [0]>} : vector<2x16x8xf32>, vector<2x16x8xf32>, vector<2x16x16xf32> -> vector<2x16x16xf32>
    "tpu.trace_stop"() : () -> ()
    %cst_24 = arith.constant dense<0xFF800000> : vector<2x16xf32>
    %67 = vector.multi_reduction <maximumf>, %66, %cst_24 [2] : vector<2x16x16xf32> to vector<2x16xf32>
    %68 = vector.shape_cast %67 : vector<2x16xf32> to vector<2x16x1xf32>
    %69 = vector.broadcast %68 : vector<2x16x1xf32> to vector<2x16x16xf32>
    %70 = arith.subf %66, %69 : vector<2x16x16xf32>
    %71 = math.exp %70 : vector<2x16x16xf32>
    %cst_25 = arith.constant dense<0.000000e+00> : vector<2x16xf32>
    %72 = vector.multi_reduction <add>, %71, %cst_25 [2] : vector<2x16x16xf32> to vector<2x16xf32>
    %73 = vector.shape_cast %72 : vector<2x16xf32> to vector<2x16x1xf32>
    %74 = vector.broadcast %73 : vector<2x16x1xf32> to vector<2x16x16xf32>
    %75 = arith.divf %71, %74 : vector<2x16x16xf32>
    "tpu.trace_start"() <{level = 10 : i32, message = "bqk,bkd->bqd"}> : () -> ()
    %cst_26 = arith.constant dense<0.000000e+00> : vector<2x16x8xf32>
    %76 = tpu.matmul %75, %65, %cst_26 {dimension_numbers = #tpu.dot_dimension_numbers<[2], [1], [1], [2], [0, 0, 0, 1, 1, 2], [0], [0]>} : vector<2x16x16xf32>, vector<2x16x8xf32>, vector<2x16x8xf32> -> vector<2x16x8xf32>
    "tpu.trace_stop"() : () -> ()
    %77 = vector.shape_cast %76 : vector<2x16x8xf32> to vector<32x8xf32>
    %78 = vector.extract_strided_slice %7 {offsets = [24, 0], sizes = [8, 32], strides = [1, 1]} : vector<32x32xf32> to vector<8x32xf32>
    %cst_27 = arith.constant dense<0.000000e+00> : vector<32x32xf32>
    %79 = tpu.matmul %77, %78, %cst_27 {dimension_numbers = #tpu.dot_dimension_numbers<[1], [0], [0], [1], [0, 0, 1, 1], [], []>} : vector<32x8xf32>, vector<8x32xf32>, vector<32x32xf32> -> vector<32x32xf32>
    %80 = arith.addf %62, %79 : vector<32x32xf32>
    %c0_28 = arith.constant 0 : index
    %c0_29 = arith.constant 0 : index
    %81 = vector.load %arg5[%c0_28, %c0_29] : memref<1x32xf32, #tpu.memory_space<vmem>>, vector<1x32xf32>
    %82 = vector.broadcast %81 : vector<1x32xf32> to vector<32x32xf32>
    %83 = arith.addf %80, %82 : vector<32x32xf32>
    %c0_30 = arith.constant 0 : index
    %c0_31 = arith.constant 0 : index
    %84 = vector.load %arg6[%c0_30, %c0_31] : memref<32x32xf32, #tpu.memory_space<vmem>>, vector<32x32xf32>
    tpu.vector_store %arg6[%c0_30, %c0_31], %83 {strides = array<i32>} : memref<32x32xf32, #tpu.memory_space<vmem>>, vector<32x32xf32>,
    return
  }
  func.func @transform_0(%arg0: i32) -> (i32, i32) {
    %c0_i32 = arith.constant 0 : i32
    %c0_i32_0 = arith.constant 0 : i32
    %c0_i32_1 = arith.constant 0 : i32
    return %c0_i32, %c0_i32_0 : i32, i32
  }
  func.func @transform_1(%arg0: i32) -> (i32, i32) {
    %c0_i32 = arith.constant 0 : i32
    %c0_i32_0 = arith.constant 0 : i32
    %c0_i32_1 = arith.constant 0 : i32
    return %c0_i32, %c0_i32_0 : i32, i32
  }
  func.func @transform_2(%arg0: i32) -> (i32, i32) {
    %c0_i32 = arith.constant 0 : i32
    %c0_i32_0 = arith.constant 0 : i32
    %c0_i32_1 = arith.constant 0 : i32
    return %c0_i32, %c0_i32_0 : i32, i32
  }
  func.func @transform_3(%arg0: i32) -> (i32, i32) {
    %c0_i32 = arith.constant 0 : i32
    %c0_i32_0 = arith.constant 0 : i32
    %c0_i32_1 = arith.constant 0 : i32
    return %c0_i32, %c0_i32_0 : i32, i32
  }
  func.func @transform_4(%arg0: i32) -> (i32, i32) {
    %c0_i32 = arith.constant 0 : i32
    %c0_i32_0 = arith.constant 0 : i32
    %c0_i32_1 = arith.constant 0 : i32
    return %c0_i32, %c0_i32_0 : i32, i32
  }
  func.func @transform_5(%arg0: i32) -> (i32, i32) {
    %c0_i32 = arith.constant 0 : i32
    %c0_i32_0 = arith.constant 0 : i32
    %c0_i32_1 = arith.constant 0 : i32
    return %c0_i32, %c0_i32_0 : i32, i32
  }
}

</mosaic_0001>

<llo_original>
// kernel: tpu_custom_call.1
$region0: #{tpu_custom_call.1}
  #allocation0 [shape = 'u32[]', space=smem, size = 0x4, offset = 0x4, fixed_abs, tag = 'smem constant byte address 0x4 - core index']
  #allocation1 [shape = 'u32[144,128]{1,0:T(1,128)}', space=vmem, size = 0x12000, scoped, tag = 'internal scratch']
  %s0 = inlined_call_operand.hbm [shape: f32[32,32], index: 0, kind: input, shape index: {}]
  %s1 = inlined_call_operand.hbm [shape: f32[32,96], index: 1, kind: input, shape index: {}]
  %s2 = inlined_call_operand.vmem [shape: f32[1,96], index: 2, kind: input, shape index: {}]
  %s3 = inlined_call_operand.hbm [shape: f32[32,32], index: 3, kind: input, shape index: {}]
  %s4 = inlined_call_operand.vmem [shape: f32[1,32], index: 4, kind: input, shape index: {}]
  %s5 = inlined_call_operand.hbm [shape: f32[32,32], index: 5, kind: output, shape index: {}]
  %s6 = sld [smem:[#allocation0]]
  $region42: #{tpu_custom_call.1} parent=0
    _
  %s8 = ssub.s32 1, %s6
  %s9 = scalar_select 0, %s8, %s6
  $region1: #{tpu_custom_call.1} parent=0
    #allocation2 [shape = 'u8[16384]{0}', space=vmem, size = 0x4000, scoped, tag = 'input window, operand 0, single buffered']
    #allocation3 [shape = 's32[1]{0}', space=sflag, size = 0x4, scoped, tag = 'scoped memory for tpu_custom_call.1']
    #allocation4 [shape = 's32[1]{0}', space=sflag, size = 0x4, scoped, tag = 'scoped memory for tpu_custom_call.1']
    #allocation5 [shape = 'u8[16384]{0}', space=vmem, size = 0x4000, scoped, tag = 'input window, operand 1, single buffered']
    #allocation6 [shape = 's32[1]{0}', space=sflag, size = 0x4, scoped, tag = 'scoped memory for tpu_custom_call.1']
    #allocation7 [shape = 'u8[16384]{0}', space=vmem, size = 0x4000, scoped, tag = 'input window, operand 3, single buffered']
    #allocation8 [shape = 'u8[16384]{0}', space=vmem, size = 0x4000, scoped, tag = 'output window, operand 0, single buffered']
    %10 = vsyncpa [#allocation3], 0
    %11 = vsyncpa [#allocation6], 0
    %12 = vsyncpa [#allocation4], 0
    // Predicated region
    $region2: #{tpu_custom_call.1} parent=1 // pred_check
      _
    $region3: #{tpu_custom_call.1} parent=1 // pred_check_branch
      %14 = sbr.rel (0) target = $region5
    $region4: #{tpu_custom_call.1} parent=1 // pred_region
      %s16 = ssub.s32 512, 512
      %17 = vsyncadd [#allocation3], %s16
      %s18 = sshll.u32 [#allocation2], 4
      %s19 = int_to_ptr.vmem [resolvable:$true] %s18
      %24 = dma.hbm_to_vmem [thread:$0]  %s0, 512, %s19, [#allocation3], 128, 128, 8
    $region5: #{tpu_custom_call.1} parent=1 // pred_fallthru
      _
    // Predicated region
    $region6: #{tpu_custom_call.1} parent=1 // pred_check
      _
    $region7: #{tpu_custom_call.1} parent=1 // pred_check_branch
      %26 = sbr.rel (0) target = $region9
    $region8: #{tpu_custom_call.1} parent=1 // pred_region
      %s28 = ssub.s32 512, 512
      %29 = vsyncadd [#allocation6], %s28
      %s30 = sshll.u32 [#allocation5], 4
      %s31 = int_to_ptr.vmem [resolvable:$true] %s30
      %36 = dma.hbm_to_vmem [thread:$0]  %s1, 512, %s31, [#allocation6], 128, 128, 8
    $region9: #{tpu_custom_call.1} parent=1 // pred_fallthru
      _
    // Predicated region
    $region10: #{tpu_custom_call.1} parent=1 // pred_check
      _
    $region11: #{tpu_custom_call.1} parent=1 // pred_check_branch
      %38 = sbr.rel (0) target = $region13
    $region12: #{tpu_custom_call.1} parent=1 // pred_region
      _
    $region13: #{tpu_custom_call.1} parent=1 // pred_fallthru
      _
    // Predicated region
    $region14: #{tpu_custom_call.1} parent=1 // pred_check
      _
    $region15: #{tpu_custom_call.1} parent=1 // pred_check_branch
      %40 = sbr.rel (0) target = $region17
    $region16: #{tpu_custom_call.1} parent=1 // pred_region
      %s42 = ssub.s32 512, 512
      %43 = vsyncadd [#allocation6], %s42
      %s44 = sshll.u32 [#allocation7], 4
      %s45 = int_to_ptr.vmem [resolvable:$true] %s44
      %50 = dma.hbm_to_vmem [thread:$0]  %s3, 512, %s45, [#allocation6], 128, 128, 8
    $region17: #{tpu_custom_call.1} parent=1 // pred_fallthru
      _
    // Predicated region
    $region18: #{tpu_custom_call.1} parent=1 // pred_check
      _
    $region19: #{tpu_custom_call.1} parent=1 // pred_check_branch
      %52 = sbr.rel (0) target = $region21
    $region20: #{tpu_custom_call.1} parent=1 // pred_region
      _
    $region21: #{tpu_custom_call.1} parent=1 // pred_fallthru
      _
    // Predicated region
    $region22: #{tpu_custom_call.1} parent=1 // pred_check
      _
    $region23: #{tpu_custom_call.1} parent=1 // pred_check_branch
      %54 = sbr.rel (0) target = $region25
    $region24: #{tpu_custom_call.1} parent=1 // pred_region
      %55 = dma.done [#allocation3], 512
    $region25: #{tpu_custom_call.1} parent=1 // pred_fallthru
      _
    // Predicated region
    $region26: #{tpu_custom_call.1} parent=1 // pred_check
      _
    $region27: #{tpu_custom_call.1} parent=1 // pred_check_branch
      %57 = sbr.rel (0) target = $region29
    $region28: #{tpu_custom_call.1} parent=1 // pred_region
      %58 = dma.done [#allocation6], 512
    $region29: #{tpu_custom_call.1} parent=1 // pred_fallthru
      _
    // Predicated region
    $region30: #{tpu_custom_call.1} parent=1 // pred_check
      _
    $region31: #{tpu_custom_call.1} parent=1 // pred_check_branch
      %60 = sbr.rel (0) target = $region33
    $region32: #{tpu_custom_call.1} parent=1 // pred_region
      %61 = dma.done [#allocation6], 512
    $region33: #{tpu_custom_call.1} parent=1 // pred_fallthru
      _
    %v62 = vld [vmem:[#allocation2] sm:$0xff]
    %v63 = vld [vmem:[#allocation2 + $0x8] sm:$0xff]
    %v64 = vld [vmem:[#allocation2 + $0x10] sm:$0xff]
    %v65 = vld [vmem:[#allocation2 + $0x18] sm:$0xff]
    %v66 = vld [vmem:[#allocation5] sm:$0xff]
    %v67 = vld [vmem:[#allocation5 + $0x8] sm:$0xff]
    %v68 = vld [vmem:[#allocation5 + $0x10] sm:$0xff]
    %v69 = vld [vmem:[#allocation5 + $0x18] sm:$0xff]
    %v70 = vld [vmem:[%s2] sm:$0x1]
    %v72 = vlaneseq
    %v73 = vshrl.u32 %v72, 7
    %v74 = vsub.s32 0, %v73
    %v75 = vrot.slane %v70, %v74
    %vm77 = vcmask 261120
    %v79 = vsel %vm77, %v62, 0
    %v82 = vsel %vm77, %v63, 0
    %v85 = vsel %vm77, %v64, 0
    %v88 = vsel %vm77, %v65, 0
    %90 = vmatprep.subr.mxu0 0.0
    %91 = vmatpush1.msra.mxu0 %v66
    %92 = vmatprep.subr.mxu0 0.0
    %93 = vmatpush1.msra.mxu0 %v67
    %94 = vmatprep.subr.mxu0 0.0
    %95 = vmatpush1.msra.mxu0 %v68
    %96 = vmatprep.subr.mxu0 0.0
    %97 = vmatpush1.msra.mxu0 %v69
    %98 = vmatprep.subr.mxu0 0.0
    %99 = vmatpush1.msra.mxu0 0.0
    %100 = vmatprep.subr.mxu0 0.0
    %101 = vmatpush1.msra.mxu0 0.0
    %102 = vmatprep.subr.mxu0 0.0
    %103 = vmatpush1.msra.mxu0 0.0
    %104 = vmatprep.subr.mxu0 0.0
    %105 = vmatpush1.msra.mxu0 0.0
    %106 = vmatprep.subr.mxu0 0.0
    %107 = vmatpush1.msra.mxu0 0.0
    %108 = vmatprep.subr.mxu0 0.0
    %109 = vmatpush1.msra.mxu0 0.0
    %110 = vmatprep.subr.mxu0 0.0
    %111 = vmatpush1.msra.mxu0 0.0
    %112 = vmatprep.subr.mxu0 0.0
    %113 = vmatpush1.msra.mxu0 0.0
    %114 = vmatprep.subr.mxu0 0.0
    %115 = vmatpush1.msra.mxu0 0.0
    %116 = vmatprep.subr.mxu0 0.0
    %117 = vmatpush1.msra.mxu0 0.0
    %118 = vmatprep.subr.mxu0 0.0
    %119 = vmatpush1.msra.mxu0 0.0
    %120 = vmatprep.subr.mxu0 0.0
    %121 = vmatpush1.msra.mxu0 0.0
    %122 = vmatprep.subr.mxu0 0.0
    %123 = vmatpush1.msra.mxu0 0.0
    %124 = vmatprep.subr.mxu0 0.0
    %125 = vmatpush1.msra.mxu0 0.0
    %126 = vmatprep.subr.mxu0 0.0
    %127 = vmatpush1.msra.mxu0 0.0
    %128 = vmatprep.subr.mxu0 0.0
    %129 = vmatpush1.msra.mxu0 0.0
    %130 = vmatprep.subr.mxu0 0.0
    %131 = vmatpush1.msra.mxu0 0.0
    %132 = vmatprep.subr.mxu0 0.0
    %133 = vmatpush1.msra.mxu0 0.0
    %134 = vmatprep.subr.mxu0 0.0
    %135 = vmatpush1.msra.mxu0 0.0
    %136 = vmatprep.subr.mxu0 0.0
    %137 = vmatpush1.msra.mxu0 0.0
    %138 = vmatprep.subr.mxu0 0.0
    %139 = vmatpush1.msra.mxu0 0.0
    %140 = vmatprep.subr.mxu0 0.0
    %141 = vmatpush1.msra.mxu0 0.0
    %142 = vmatprep.subr.mxu0 0.0
    %143 = vmatpush1.msra.mxu0 0.0
    %144 = vmatprep.subr.mxu0 0.0
    %145 = vmatpush1.msra.mxu0 0.0
    %146 = vmatprep.subr.mxu0 0.0
    %147 = vmatpush1.msra.mxu0 0.0
    %148 = vmatprep.subr.mxu0 0.0
    %149 = vmatpush1.msra.mxu0 0.0
    %150 = vmatprep.subr.mxu0 0.0
    %151 = vmatpush1.msra.mxu0 0.0
    %152 = vmatprep.subr.mxu0 0.0
    %153 = vmatpush1.msra.mxu0 0.0
    %154 = vmatprep.mubr.f32.mxu0 0.0
    %155 = vmatmul.mubr.f32.gmra.mrb[0].mxu0 %v79
    %v156 = vpop.f32.mrb[0].mxu0
    %v157 = vadd.f32 %v75, %v156
    %v158 = vpop.f32.mrb[0].mxu0
    %159 = vmatprep.mubr.f32.mxu0 0.0
    %160 = vmatmul.mubr.f32.gmra.mrb[0].mxu0 %v82
    %v161 = vpop.f32.mrb[0].mxu0
    %v162 = vadd.f32 %v75, %v161
    %v163 = vpop.f32.mrb[0].mxu0
    %164 = vmatprep.mubr.f32.mxu0 0.0
    %165 = vmatmul.mubr.f32.gmra.mrb[0].mxu0 %v85
    %v166 = vpop.f32.mrb[0].mxu0
    %v167 = vadd.f32 %v75, %v166
    %v168 = vpop.f32.mrb[0].mxu0
    %169 = vmatprep.mubr.f32.mxu0 0.0
    %170 = vmatmul.mubr.f32.gmra.mrb[0].mxu0 %v88
    %v171 = vpop.f32.mrb[0].mxu0
    %v172 = vadd.f32 %v75, %v171
    %v173 = vpop.f32.mrb[0].mxu0
    %174 = vdwg.mxu0
    %v175 = vld [vmem:[#allocation7] sm:$0xff]
    %v176 = vld [vmem:[#allocation7 + $0x8] sm:$0xff]
    %v177 = vld [vmem:[#allocation7 + $0x10] sm:$0xff]
    %v178 = vld [vmem:[#allocation7 + $0x18] sm:$0xff]
    %181 = vrot.lane.b32.xlu0 %v157, 96
    %v182 = vpop.permute.xlu0 %181
    %183 = vrot.lane.b32.xlu0 %v162, 96
    %v184 = vpop.permute.xlu0 %183
    %vm185 = vcmask 64512
    %v186 = vsel %vm185, %v157, 0
    %v188 = vsel %vm185, %v162, 0
    %v190 = vsel %vm185, %v182, 0
    %v192 = vsel %vm185, %v184, 0
    %194 = vmatprep.subr.mxu0 0.0
    %195 = vmatpush1.xpose.msra.mxu0 %v190
    %196 = vmatprep.subr.mxu0 0.0
    %197 = vmatpush1.xpose.msra.mxu0 %v192
    %198 = vmatprep.subr.mxu0 0.0
    %199 = vmatpush1.xpose.msra.mxu0 0.0
    %200 = vmatprep.subr.mxu0 0.0
    %201 = vmatpush1.xpose.msra.mxu0 0.0
    %202 = vmatprep.subr.mxu0 0.0
    %203 = vmatpush1.xpose.msra.mxu0 0.0
    %204 = vmatprep.subr.mxu0 0.0
    %205 = vmatpush1.xpose.msra.mxu0 0.0
    %206 = vmatprep.subr.mxu0 0.0
    %207 = vmatpush1.xpose.msra.mxu0 0.0
    %208 = vmatprep.subr.mxu0 0.0
    %209 = vmatpush1.xpose.msra.mxu0 0.0
    %210 = vmatprep.subr.mxu0 0.0
    %211 = vmatpush1.xpose.msra.mxu0 0.0
    %212 = vmatprep.subr.mxu0 0.0
    %213 = vmatpush1.xpose.msra.mxu0 0.0
    %214 = vmatprep.subr.mxu0 0.0
    %215 = vmatpush1.xpose.msra.mxu0 0.0
    %216 = vmatprep.subr.mxu0 0.0
    %217 = vmatpush1.xpose.msra.mxu0 0.0
    %218 = vmatprep.subr.mxu0 0.0
    %219 = vmatpush1.xpose.msra.mxu0 0.0
    %220 = vmatprep.subr.mxu0 0.0
    %221 = vmatpush1.xpose.msra.mxu0 0.0
    %222 = vmatprep.subr.mxu0 0.0
    %223 = vmatpush1.xpose.msra.mxu0 0.0
    %224 = vmatprep.subr.mxu0 0.0
    %225 = vmatpush1.xpose.msra.mxu0 0.0
    %226 = vmatprep.subr.mxu0 0.0
    %227 = vmatpush1.xpose.msra.mxu0 0.0
    %228 = vmatprep.subr.mxu0 0.0
    %229 = vmatpush1.xpose.msra.mxu0 0.0
    %230 = vmatprep.subr.mxu0 0.0
    %231 = vmatpush1.xpose.msra.mxu0 0.0
    %232 = vmatprep.subr.mxu0 0.0
    %233 = vmatpush1.xpose.msra.mxu0 0.0
    %234 = vmatprep.subr.mxu0 0.0
    %235 = vmatpush1.xpose.msra.mxu0 0.0
    %236 = vmatprep.subr.mxu0 0.0
    %237 = vmatpush1.xpose.msra.mxu0 0.0
    %238 = vmatprep.subr.mxu0 0.0
    %239 = vmatpush1.xpose.msra.mxu0 0.0
    %240 = vmatprep.subr.mxu0 0.0
    %241 = vmatpush1.xpose.msra.mxu0 0.0
    %242 = vmatprep.subr.mxu0 0.0
    %243 = vmatpush1.xpose.msra.mxu0 0.0
    %244 = vmatprep.subr.mxu0 0.0
    %245 = vmatpush1.xpose.msra.mxu0 0.0
    %246 = vmatprep.subr.mxu0 0.0
    %247 = vmatpush1.xpose.msra.mxu0 0.0
    %248 = vmatprep.subr.mxu0 0.0
    %249 = vmatpush1.xpose.msra.mxu0 0.0
    %250 = vmatprep.subr.mxu0 0.0
    %251 = vmatpush1.xpose.msra.mxu0 0.0
    %252 = vmatprep.subr.mxu0 0.0
    %253 = vmatpush1.xpose.msra.mxu0 0.0
    %254 = vmatprep.subr.mxu0 0.0
    %255 = vmatpush1.xpose.msra.mxu0 0.0
    %256 = vmatprep.subr.mxu0 0.0
    %257 = vmatpush1.xpose.msra.mxu0 0.0
    %258 = vmatprep.mubr.f32.mxu0 0.0
    %259 = vmatmul.mubr.f32.gmra.mrb[0].mxu0 %v186
    %v260 = vpop.f32.mrb[0].mxu0
    %v261 = vadd.f32 0.0, %v260
    %v262 = vpop.f32.mrb[0].mxu0
    %263 = vmatprep.mubr.f32.mxu0 0.0
    %264 = vmatmul.mubr.f32.gmra.mrb[0].mxu0 %v188
    %v265 = vpop.f32.mrb[0].mxu0
    %v266 = vadd.f32 0.0, %v265
    %v267 = vpop.f32.mrb[0].mxu0
    %268 = vdwg.mxu0
    %271 = vrot.lane.b32.xlu0 %v167, 96
    %v272 = vpop.permute.xlu0 %271
    %273 = vrot.lane.b32.xlu0 %v172, 96
    %v274 = vpop.permute.xlu0 %273
    %v275 = vsel %vm185, %v167, 0
    %v277 = vsel %vm185, %v172, 0
    %v279 = vsel %vm185, %v272, 0
    %v281 = vsel %vm185, %v274, 0
    %283 = vmatprep.subr.mxu0 0.0
    %284 = vmatpush1.xpose.msra.mxu0 %v279
    %285 = vmatprep.subr.mxu0 0.0
    %286 = vmatpush1.xpose.msra.mxu0 %v281
    %287 = vmatprep.subr.mxu0 0.0
    %288 = vmatpush1.xpose.msra.mxu0 0.0
    %289 = vmatprep.subr.mxu0 0.0
    %290 = vmatpush1.xpose.msra.mxu0 0.0
    %291 = vmatprep.subr.mxu0 0.0
    %292 = vmatpush1.xpose.msra.mxu0 0.0
    %293 = vmatprep.subr.mxu0 0.0
    %294 = vmatpush1.xpose.msra.mxu0 0.0
    %295 = vmatprep.subr.mxu0 0.0
    %296 = vmatpush1.xpose.msra.mxu0 0.0
    %297 = vmatprep.subr.mxu0 0.0
    %298 = vmatpush1.xpose.msra.mxu0 0.0
    %299 = vmatprep.subr.mxu0 0.0
    %300 = vmatpush1.xpose.msra.mxu0 0.0
    %301 = vmatprep.subr.mxu0 0.0
    %302 = vmatpush1.xpose.msra.mxu0 0.0
    %303 = vmatprep.subr.mxu0 0.0
    %304 = vmatpush1.xpose.msra.mxu0 0.0
    %305 = vmatprep.subr.mxu0 0.0
    %306 = vmatpush1.xpose.msra.mxu0 0.0
    %307 = vmatprep.subr.mxu0 0.0
    %308 = vmatpush1.xpose.msra.mxu0 0.0
    %309 = vmatprep.subr.mxu0 0.0
    %310 = vmatpush1.xpose.msra.mxu0 0.0
    %311 = vmatprep.subr.mxu0 0.0
    %312 = vmatpush1.xpose.msra.mxu0 0.0
    %313 = vmatprep.subr.mxu0 0.0
    %314 = vmatpush1.xpose.msra.mxu0 0.0
    %315 = vmatprep.subr.mxu0 0.0
    %316 = vmatpush1.xpose.msra.mxu0 0.0
    %317 = vmatprep.subr.mxu0 0.0
    %318 = vmatpush1.xpose.msra.mxu0 0.0
    %319 = vmatprep.subr.mxu0 0.0
    %320 = vmatpush1.xpose.msra.mxu0 0.0
    %321 = vmatprep.subr.mxu0 0.0
    %322 = vmatpush1.xpose.msra.mxu0 0.0
    %323 = vmatprep.subr.mxu0 0.0
    %324 = vmatpush1.xpose.msra.mxu0 0.0
    %325 = vmatprep.subr.mxu0 0.0
    %326 = vmatpush1.xpose.msra.mxu0 0.0
    %327 = vmatprep.subr.mxu0 0.0
    %328 = vmatpush1.xpose.msra.mxu0 0.0
    %329 = vmatprep.subr.mxu0 0.0
    %330 = vmatpush1.xpose.msra.mxu0 0.0
    %331 = vmatprep.subr.mxu0 0.0
    %332 = vmatpush1.xpose.msra.mxu0 0.0
    %333 = vmatprep.subr.mxu0 0.0
    %334 = vmatpush1.xpose.msra.mxu0 0.0
    %335 = vmatprep.subr.mxu0 0.0
    %336 = vmatpush1.xpose.msra.mxu0 0.0
    %337 = vmatprep.subr.mxu0 0.0
    %338 = vmatpush1.xpose.msra.mxu0 0.0
    %339 = vmatprep.subr.mxu0 0.0
    %340 = vmatpush1.xpose.msra.mxu0 0.0
    %341 = vmatprep.subr.mxu0 0.0
    %342 = vmatpush1.xpose.msra.mxu0 0.0
    %343 = vmatprep.subr.mxu0 0.0
    %344 = vmatpush1.xpose.msra.mxu0 0.0
    %345 = vmatprep.subr.mxu0 0.0
    %346 = vmatpush1.xpose.msra.mxu0 0.0
    %347 = vmatprep.mubr.f32.mxu0 0.0
    %348 = vmatmul.mubr.f32.gmra.mrb[0].mxu0 %v275
    %v349 = vpop.f32.mrb[0].mxu0
    %v350 = vadd.f32 0.0, %v349
    %v351 = vpop.f32.mrb[0].mxu0
    %352 = vmatprep.mubr.f32.mxu0 0.0
    %353 = vmatmul.mubr.f32.gmra.mrb[0].mxu0 %v277
    %v354 = vpop.f32.mrb[0].mxu0
    %v355 = vadd.f32 0.0, %v354
    %v356 = vpop.f32.mrb[0].mxu0
    %357 = vdwg.mxu0
    %vm358 = vcmask 130048
    %v359 = vsel %vm358, %v261, -inf
    %360 = vmax.xlane.f32.xlu0 %v359
    %v361 = vpop.xlane.xlu0 %360
    %v362 = vsel %vm358, %v266, -inf
    %363 = vmax.xlane.f32.xlu0 %v362
    %v364 = vpop.xlane.xlu0 %363
    %v365 = vsel %vm358, %v350, -inf
    %366 = vmax.xlane.f32.xlu0 %v365
    %v367 = vpop.xlane.xlu0 %366
    %v368 = vsel %vm358, %v355, -inf
    %369 = vmax.xlane.f32.xlu0 %v368
    %v370 = vpop.xlane.xlu0 %369
    %v371 = vsub.f32 %v261, %v361
    %v372 = vsub.f32 %v266, %v364
    %v373 = vsub.f32 %v350, %v367
    %v374 = vsub.f32 %v355, %v370
    %v375 = vmul.f32 %v371, 1.442695
    %v376 = vpow.pop %v375
    %v377 = vmul.f32 %v372, 1.442695
    %v378 = vpow.pop %v377
    %v379 = vmul.f32 %v373, 1.442695
    %v380 = vpow.pop %v379
    %v381 = vmul.f32 %v374, 1.442695
    %v382 = vpow.pop %v381
    %v383 = vsel %vm358, %v376, 0.0
    %384 = vadd.xlane.f32.xlu0 %v383
    %v385 = vpop.xlane.xlu0 %384
    %v386 = vsel %vm358, %v378, 0.0
    %387 = vadd.xlane.f32.xlu0 %v386
    %v388 = vpop.xlane.xlu0 %387
    %v389 = vsel %vm358, %v380, 0.0
    %390 = vadd.xlane.f32.xlu0 %v389
    %v391 = vpop.xlane.xlu0 %390
    %v392 = vsel %vm358, %v382, 0.0
    %393 = vadd.xlane.f32.xlu0 %v392
    %v394 = vpop.xlane.xlu0 %393
    %v395 = vrcp.pop %v385
    %v396 = vmul.f32 %v376, %v395
    %v397 = vrcp.pop %v388
    %v398 = vmul.f32 %v378, %v397
    %v399 = vrcp.pop %v391
    %v400 = vmul.f32 %v380, %v399
    %v401 = vrcp.pop %v394
    %v402 = vmul.f32 %v382, %v401
    %403 = vrot.lane.b32.xlu0 %v157, 64
    %v404 = vpop.permute.xlu0 %403
    %405 = vrot.lane.b32.xlu0 %v162, 64
    %v406 = vpop.permute.xlu0 %405
    %v410 = vsel %vm358, %v396, 0
    %v413 = vsel %vm358, %v398, 0
    %415 = vmatprep.subr.mxu0 0.0
    %416 = vmatpush1.msra.mxu0 %v404
    %417 = vmatprep.subr.mxu0 0.0
    %418 = vmatpush1.msra.mxu0 %v406
    %419 = vmatprep.subr.mxu0 0.0
    %420 = vmatpush1.msra.mxu0 0.0
    %421 = vmatprep.subr.mxu0 0.0
    %422 = vmatpush1.msra.mxu0 0.0
    %423 = vmatprep.subr.mxu0 0.0
    %424 = vmatpush1.msra.mxu0 0.0
    %425 = vmatprep.subr.mxu0 0.0
    %426 = vmatpush1.msra.mxu0 0.0
    %427 = vmatprep.subr.mxu0 0.0
    %428 = vmatpush1.msra.mxu0 0.0
    %429 = vmatprep.subr.mxu0 0.0
    %430 = vmatpush1.msra.mxu0 0.0
    %431 = vmatprep.subr.mxu0 0.0
    %432 = vmatpush1.msra.mxu0 0.0
    %433 = vmatprep.subr.mxu0 0.0
    %434 = vmatpush1.msra.mxu0 0.0
    %435 = vmatprep.subr.mxu0 0.0
    %436 = vmatpush1.msra.mxu0 0.0
    %437 = vmatprep.subr.mxu0 0.0
    %438 = vmatpush1.msra.mxu0 0.0
    %439 = vmatprep.subr.mxu0 0.0
    %440 = vmatpush1.msra.mxu0 0.0
    %441 = vmatprep.subr.mxu0 0.0
    %442 = vmatpush1.msra.mxu0 0.0
    %443 = vmatprep.subr.mxu0 0.0
    %444 = vmatpush1.msra.mxu0 0.0
    %445 = vmatprep.subr.mxu0 0.0
    %446 = vmatpush1.msra.mxu0 0.0
    %447 = vmatprep.subr.mxu0 0.0
    %448 = vmatpush1.msra.mxu0 0.0
    %449 = vmatprep.subr.mxu0 0.0
    %450 = vmatpush1.msra.mxu0 0.0
    %451 = vmatprep.subr.mxu0 0.0
    %452 = vmatpush1.msra.mxu0 0.0
    %453 = vmatprep.subr.mxu0 0.0
    %454 = vmatpush1.msra.mxu0 0.0
    %455 = vmatprep.subr.mxu0 0.0
    %456 = vmatpush1.msra.mxu0 0.0
    %457 = vmatprep.subr.mxu0 0.0
    %458 = vmatpush1.msra.mxu0 0.0
    %459 = vmatprep.subr.mxu0 0.0
    %460 = vmatpush1.msra.mxu0 0.0
    %461 = vmatprep.subr.mxu0 0.0
    %462 = vmatpush1.msra.mxu0 0.0
    %463 = vmatprep.subr.mxu0 0.0
    %464 = vmatpush1.msra.mxu0 0.0
    %465 = vmatprep.subr.mxu0 0.0
    %466 = vmatpush1.msra.mxu0 0.0
    %467 = vmatprep.subr.mxu0 0.0
    %468 = vmatpush1.msra.mxu0 0.0
    %469 = vmatprep.subr.mxu0 0.0
    %470 = vmatpush1.msra.mxu0 0.0
    %471 = vmatprep.subr.mxu0 0.0
    %472 = vmatpush1.msra.mxu0 0.0
    %473 = vmatprep.subr.mxu0 0.0
    %474 = vmatpush1.msra.mxu0 0.0
    %475 = vmatprep.subr.mxu0 0.0
    %476 = vmatpush1.msra.mxu0 0.0
    %477 = vmatprep.subr.mxu0 0.0
    %478 = vmatpush1.msra.mxu0 0.0
    %479 = vmatprep.mubr.f32.mxu0 0.0
    %480 = vmatmul.mubr.f32.gmra.mrb[0].mxu0 %v410
    %v481 = vpop.f32.mrb[0].mxu0
    %v482 = vadd.f32 0.0, %v481
    %v483 = vpop.f32.mrb[0].mxu0
    %484 = vmatprep.mubr.f32.mxu0 0.0
    %485 = vmatmul.mubr.f32.gmra.mrb[0].mxu0 %v413
    %v486 = vpop.f32.mrb[0].mxu0
    %v487 = vadd.f32 0.0, %v486
    %v488 = vpop.f32.mrb[0].mxu0
    %489 = vdwg.mxu0
    %490 = vrot.lane.b32.xlu0 %v167, 64
    %v491 = vpop.permute.xlu0 %490
    %492 = vrot.lane.b32.xlu0 %v172, 64
    %v493 = vpop.permute.xlu0 %492
    %v497 = vsel %vm358, %v400, 0
    %v500 = vsel %vm358, %v402, 0
    %502 = vmatprep.subr.mxu0 0.0
    %503 = vmatpush1.msra.mxu0 %v491
    %504 = vmatprep.subr.mxu0 0.0
    %505 = vmatpush1.msra.mxu0 %v493
    %506 = vmatprep.subr.mxu0 0.0
    %507 = vmatpush1.msra.mxu0 0.0
    %508 = vmatprep.subr.mxu0 0.0
    %509 = vmatpush1.msra.mxu0 0.0
    %510 = vmatprep.subr.mxu0 0.0
    %511 = vmatpush1.msra.mxu0 0.0
    %512 = vmatprep.subr.mxu0 0.0
    %513 = vmatpush1.msra.mxu0 0.0
    %514 = vmatprep.subr.mxu0 0.0
    %515 = vmatpush1.msra.mxu0 0.0
    %516 = vmatprep.subr.mxu0 0.0
    %517 = vmatpush1.msra.mxu0 0.0
    %518 = vmatprep.subr.mxu0 0.0
    %519 = vmatpush1.msra.mxu0 0.0
    %520 = vmatprep.subr.mxu0 0.0
    %521 = vmatpush1.msra.mxu0 0.0
    %522 = vmatprep.subr.mxu0 0.0
    %523 = vmatpush1.msra.mxu0 0.0
    %524 = vmatprep.subr.mxu0 0.0
    %525 = vmatpush1.msra.mxu0 0.0
    %526 = vmatprep.subr.mxu0 0.0
    %527 = vmatpush1.msra.mxu0 0.0
    %528 = vmatprep.subr.mxu0 0.0
    %529 = vmatpush1.msra.mxu0 0.0
    %530 = vmatprep.subr.mxu0 0.0
    %531 = vmatpush1.msra.mxu0 0.0
    %532 = vmatprep.subr.mxu0 0.0
    %533 = vmatpush1.msra.mxu0 0.0
    %534 = vmatprep.subr.mxu0 0.0
    %535 = vmatpush1.msra.mxu0 0.0
    %536 = vmatprep.subr.mxu0 0.0
    %537 = vmatpush1.msra.mxu0 0.0
    %538 = vmatprep.subr.mxu0 0.0
    %539 = vmatpush1.msra.mxu0 0.0
    %540 = vmatprep.subr.mxu0 0.0
    %541 = vmatpush1.msra.mxu0 0.0
    %542 = vmatprep.subr.mxu0 0.0
    %543 = vmatpush1.msra.mxu0 0.0
    %544 = vmatprep.subr.mxu0 0.0
    %545 = vmatpush1.msra.mxu0 0.0
    %546 = vmatprep.subr.mxu0 0.0
    %547 = vmatpush1.msra.mxu0 0.0
    %548 = vmatprep.subr.mxu0 0.0
    %549 = vmatpush1.msra.mxu0 0.0
    %550 = vmatprep.subr.mxu0 0.0
    %551 = vmatpush1.msra.mxu0 0.0
    %552 = vmatprep.subr.mxu0 0.0
    %553 = vmatpush1.msra.mxu0 0.0
    %554 = vmatprep.subr.mxu0 0.0
    %555 = vmatpush1.msra.mxu0 0.0
    %556 = vmatprep.subr.mxu0 0.0
    %557 = vmatpush1.msra.mxu0 0.0
    %558 = vmatprep.subr.mxu0 0.0
    %559 = vmatpush1.msra.mxu0 0.0
    %560 = vmatprep.subr.mxu0 0.0
    %561 = vmatpush1.msra.mxu0 0.0
    %562 = vmatprep.subr.mxu0 0.0
    %563 = vmatpush1.msra.mxu0 0.0
    %564 = vmatprep.subr.mxu0 0.0
    %565 = vmatpush1.msra.mxu0 0.0
    %566 = vmatprep.mubr.f32.mxu0 0.0
    %567 = vmatmul.mubr.f32.gmra.mrb[0].mxu0 %v497
    %v568 = vpop.f32.mrb[0].mxu0
    %v569 = vadd.f32 0.0, %v568
    %v570 = vpop.f32.mrb[0].mxu0
    %571 = vmatprep.mubr.f32.mxu0 0.0
    %572 = vmatmul.mubr.f32.gmra.mrb[0].mxu0 %v500
    %v573 = vpop.f32.mrb[0].mxu0
    %v574 = vadd.f32 0.0, %v573
    %v575 = vpop.f32.mrb[0].mxu0
    %576 = vdwg.mxu0
    %577 = vrot.lane.b32.xlu0 %v157, 120
    %v578 = vpop.permute.xlu0 %577
    %579 = vrot.lane.b32.xlu0 %v162, 120
    %v580 = vpop.permute.xlu0 %579
    %581 = vrot.lane.b32.xlu0 %v157, 88
    %v582 = vpop.permute.xlu0 %581
    %583 = vrot.lane.b32.xlu0 %v162, 88
    %v584 = vpop.permute.xlu0 %583
    %v585 = vsel %vm185, %v578, 0
    %v587 = vsel %vm185, %v580, 0
    %v589 = vsel %vm185, %v582, 0
    %v591 = vsel %vm185, %v584, 0
    %593 = vmatprep.subr.mxu0 0.0
    %594 = vmatpush1.xpose.msra.mxu0 %v589
    %595 = vmatprep.subr.mxu0 0.0
    %596 = vmatpush1.xpose.msra.mxu0 %v591
    %597 = vmatprep.subr.mxu0 0.0
    %598 = vmatpush1.xpose.msra.mxu0 0.0
    %599 = vmatprep.subr.mxu0 0.0
    %600 = vmatpush1.xpose.msra.mxu0 0.0
    %601 = vmatprep.subr.mxu0 0.0
    %602 = vmatpush1.xpose.msra.mxu0 0.0
    %603 = vmatprep.subr.mxu0 0.0
    %604 = vmatpush1.xpose.msra.mxu0 0.0
    %605 = vmatprep.subr.mxu0 0.0
    %606 = vmatpush1.xpose.msra.mxu0 0.0
    %607 = vmatprep.subr.mxu0 0.0
    %608 = vmatpush1.xpose.msra.mxu0 0.0
    %609 = vmatprep.subr.mxu0 0.0
    %610 = vmatpush1.xpose.msra.mxu0 0.0
    %611 = vmatprep.subr.mxu0 0.0
    %612 = vmatpush1.xpose.msra.mxu0 0.0
    %613 = vmatprep.subr.mxu0 0.0
    %614 = vmatpush1.xpose.msra.mxu0 0.0
    %615 = vmatprep.subr.mxu0 0.0
    %616 = vmatpush1.xpose.msra.mxu0 0.0
    %617 = vmatprep.subr.mxu0 0.0
    %618 = vmatpush1.xpose.msra.mxu0 0.0
    %619 = vmatprep.subr.mxu0 0.0
    %620 = vmatpush1.xpose.msra.mxu0 0.0
    %621 = vmatprep.subr.mxu0 0.0
    %622 = vmatpush1.xpose.msra.mxu0 0.0
    %623 = vmatprep.subr.mxu0 0.0
    %624 = vmatpush1.xpose.msra.mxu0 0.0
    %625 = vmatprep.subr.mxu0 0.0
    %626 = vmatpush1.xpose.msra.mxu0 0.0
    %627 = vmatprep.subr.mxu0 0.0
    %628 = vmatpush1.xpose.msra.mxu0 0.0
    %629 = vmatprep.subr.mxu0 0.0
    %630 = vmatpush1.xpose.msra.mxu0 0.0
    %631 = vmatprep.subr.mxu0 0.0
    %632 = vmatpush1.xpose.msra.mxu0 0.0
    %633 = vmatprep.subr.mxu0 0.0
    %634 = vmatpush1.xpose.msra.mxu0 0.0
    %635 = vmatprep.subr.mxu0 0.0
    %636 = vmatpush1.xpose.msra.mxu0 0.0
    %637 = vmatprep.subr.mxu0 0.0
    %638 = vmatpush1.xpose.msra.mxu0 0.0
    %639 = vmatprep.subr.mxu0 0.0
    %640 = vmatpush1.xpose.msra.mxu0 0.0
    %641 = vmatprep.subr.mxu0 0.0
    %642 = vmatpush1.xpose.msra.mxu0 0.0
    %643 = vmatprep.subr.mxu0 0.0
    %644 = vmatpush1.xpose.msra.mxu0 0.0
    %645 = vmatprep.subr.mxu0 0.0
    %646 = vmatpush1.xpose.msra.mxu0 0.0
    %647 = vmatprep.subr.mxu0 0.0
    %648 = vmatpush1.xpose.msra.mxu0 0.0
    %649 = vmatprep.subr.mxu0 0.0
    %650 = vmatpush1.xpose.msra.mxu0 0.0
    %651 = vmatprep.subr.mxu0 0.0
    %652 = vmatpush1.xpose.msra.mxu0 0.0
    %653 = vmatprep.subr.mxu0 0.0
    %654 = vmatpush1.xpose.msra.mxu0 0.0
    %655 = vmatprep.subr.mxu0 0.0
    %656 = vmatpush1.xpose.msra.mxu0 0.0
    %657 = vmatprep.mubr.f32.mxu0 0.0
    %658 = vmatmul.mubr.f32.gmra.mrb[0].mxu0 %v585
    %v659 = vpop.f32.mrb[0].mxu0
    %v660 = vadd.f32 0.0, %v659
    %v661 = vpop.f32.mrb[0].mxu0
    %662 = vmatprep.mubr.f32.mxu0 0.0
    %663 = vmatmul.mubr.f32.gmra.mrb[0].mxu0 %v587
    %v664 = vpop.f32.mrb[0].mxu0
    %v665 = vadd.f32 0.0, %v664
    %v666 = vpop.f32.mrb[0].mxu0
    %667 = vdwg.mxu0
    %668 = vrot.lane.b32.xlu0 %v167, 120
    %v669 = vpop.permute.xlu0 %668
    %670 = vrot.lane.b32.xlu0 %v172, 120
    %v671 = vpop.permute.xlu0 %670
    %672 = vrot.lane.b32.xlu0 %v167, 88
    %v673 = vpop.permute.xlu0 %672
    %674 = vrot.lane.b32.xlu0 %v172, 88
    %v675 = vpop.permute.xlu0 %674
    %v676 = vsel %vm185, %v669, 0
    %v678 = vsel %vm185, %v671, 0
    %v680 = vsel %vm185, %v673, 0
    %v682 = vsel %vm185, %v675, 0
    %684 = vmatprep.subr.mxu0 0.0
    %685 = vmatpush1.xpose.msra.mxu0 %v680
    %686 = vmatprep.subr.mxu0 0.0
    %687 = vmatpush1.xpose.msra.mxu0 %v682
    %688 = vmatprep.subr.mxu0 0.0
    %689 = vmatpush1.xpose.msra.mxu0 0.0
    %690 = vmatprep.subr.mxu0 0.0
    %691 = vmatpush1.xpose.msra.mxu0 0.0
    %692 = vmatprep.subr.mxu0 0.0
    %693 = vmatpush1.xpose.msra.mxu0 0.0
    %694 = vmatprep.subr.mxu0 0.0
    %695 = vmatpush1.xpose.msra.mxu0 0.0
    %696 = vmatprep.subr.mxu0 0.0
    %697 = vmatpush1.xpose.msra.mxu0 0.0
    %698 = vmatprep.subr.mxu0 0.0
    %699 = vmatpush1.xpose.msra.mxu0 0.0
    %700 = vmatprep.subr.mxu0 0.0
    %701 = vmatpush1.xpose.msra.mxu0 0.0
    %702 = vmatprep.subr.mxu0 0.0
    %703 = vmatpush1.xpose.msra.mxu0 0.0
    %704 = vmatprep.subr.mxu0 0.0
    %705 = vmatpush1.xpose.msra.mxu0 0.0
    %706 = vmatprep.subr.mxu0 0.0
    %707 = vmatpush1.xpose.msra.mxu0 0.0
    %708 = vmatprep.subr.mxu0 0.0
    %709 = vmatpush1.xpose.msra.mxu0 0.0
    %710 = vmatprep.subr.mxu0 0.0
    %711 = vmatpush1.xpose.msra.mxu0 0.0
    %712 = vmatprep.subr.mxu0 0.0
    %713 = vmatpush1.xpose.msra.mxu0 0.0
    %714 = vmatprep.subr.mxu0 0.0
    %715 = vmatpush1.xpose.msra.mxu0 0.0
    %716 = vmatprep.subr.mxu0 0.0
    %717 = vmatpush1.xpose.msra.mxu0 0.0
    %718 = vmatprep.subr.mxu0 0.0
    %719 = vmatpush1.xpose.msra.mxu0 0.0
    %720 = vmatprep.subr.mxu0 0.0
    %721 = vmatpush1.xpose.msra.mxu0 0.0
    %722 = vmatprep.subr.mxu0 0.0
    %723 = vmatpush1.xpose.msra.mxu0 0.0
    %724 = vmatprep.subr.mxu0 0.0
    %725 = vmatpush1.xpose.msra.mxu0 0.0
    %726 = vmatprep.subr.mxu0 0.0
    %727 = vmatpush1.xpose.msra.mxu0 0.0
    %728 = vmatprep.subr.mxu0 0.0
    %729 = vmatpush1.xpose.msra.mxu0 0.0
    %730 = vmatprep.subr.mxu0 0.0
    %731 = vmatpush1.xpose.msra.mxu0 0.0
    %732 = vmatprep.subr.mxu0 0.0
    %733 = vmatpush1.xpose.msra.mxu0 0.0
    %734 = vmatprep.subr.mxu0 0.0
    %735 = vmatpush1.xpose.msra.mxu0 0.0
    %736 = vmatprep.subr.mxu0 0.0
    %737 = vmatpush1.xpose.msra.mxu0 0.0
    %738 = vmatprep.subr.mxu0 0.0
    %739 = vmatpush1.xpose.msra.mxu0 0.0
    %740 = vmatprep.subr.mxu0 0.0
    %741 = vmatpush1.xpose.msra.mxu0 0.0
    %742 = vmatprep.subr.mxu0 0.0
    %743 = vmatpush1.xpose.msra.mxu0 0.0
    %744 = vmatprep.subr.mxu0 0.0
    %745 = vmatpush1.xpose.msra.mxu0 0.0
    %746 = vmatprep.subr.mxu0 0.0
    %747 = vmatpush1.xpose.msra.mxu0 0.0
    %748 = vmatprep.mubr.f32.mxu0 0.0
    %749 = vmatmul.mubr.f32.gmra.mrb[0].mxu0 %v676
    %v750 = vpop.f32.mrb[0].mxu0
    %v751 = vadd.f32 0.0, %v750
    %v752 = vpop.f32.mrb[0].mxu0
    %753 = vmatprep.mubr.f32.mxu0 0.0
    %754 = vmatmul.mubr.f32.gmra.mrb[0].mxu0 %v678
    %v755 = vpop.f32.mrb[0].mxu0
    %v756 = vadd.f32 0.0, %v755
    %v757 = vpop.f32.mrb[0].mxu0
    %758 = vdwg.mxu0
    %v759 = vsel %vm358, %v660, -inf
    %760 = vmax.xlane.f32.xlu0 %v759
    %v761 = vpop.xlane.xlu0 %760
    %v762 = vsel %vm358, %v665, -inf
    %763 = vmax.xlane.f32.xlu0 %v762
    %v764 = vpop.xlane.xlu0 %763
    %v765 = vsel %vm358, %v751, -inf
    %766 = vmax.xlane.f32.xlu0 %v765
    %v767 = vpop.xlane.xlu0 %766
    %v768 = vsel %vm358, %v756, -inf
    %769 = vmax.xlane.f32.xlu0 %v768
    %v770 = vpop.xlane.xlu0 %769
    %v771 = vsub.f32 %v660, %v761
    %v772 = vsub.f32 %v665, %v764
    %v773 = vsub.f32 %v751, %v767
    %v774 = vsub.f32 %v756, %v770
    %v775 = vmul.f32 %v771, 1.442695
    %v776 = vpow.pop %v775
    %v777 = vmul.f32 %v772, 1.442695
    %v778 = vpow.pop %v777
    %v779 = vmul.f32 %v773, 1.442695
    %v780 = vpow.pop %v779
    %v781 = vmul.f32 %v774, 1.442695
    %v782 = vpow.pop %v781
    %v783 = vsel %vm358, %v776, 0.0
    %784 = vadd.xlane.f32.xlu0 %v783
    %v785 = vpop.xlane.xlu0 %784
    %v786 = vsel %vm358, %v778, 0.0
    %787 = vadd.xlane.f32.xlu0 %v786
    %v788 = vpop.xlane.xlu0 %787
    %v789 = vsel %vm358, %v780, 0.0
    %790 = vadd.xlane.f32.xlu0 %v789
    %v791 = vpop.xlane.xlu0 %790
    %v792 = vsel %vm358, %v782, 0.0
    %793 = vadd.xlane.f32.xlu0 %v792
    %v794 = vpop.xlane.xlu0 %793
    %v795 = vrcp.pop %v785
    %v796 = vmul.f32 %v776, %v795
    %v797 = vrcp.pop %v788
    %v798 = vmul.f32 %v778, %v797
    %v799 = vrcp.pop %v791
    %v800 = vmul.f32 %v780, %v799
    %v801 = vrcp.pop %v794
    %v802 = vmul.f32 %v782, %v801
    %803 = vrot.lane.b32.xlu0 %v157, 56
    %v804 = vpop.permute.xlu0 %803
    %805 = vrot.lane.b32.xlu0 %v162, 56
    %v806 = vpop.permute.xlu0 %805
    %v810 = vsel %vm358, %v796, 0
    %v813 = vsel %vm358, %v798, 0
    %815 = vmatprep.subr.mxu0 0.0
    %816 = vmatpush1.msra.mxu0 %v804
    %817 = vmatprep.subr.mxu0 0.0
    %818 = vmatpush1.msra.mxu0 %v806
    %819 = vmatprep.subr.mxu0 0.0
    %820 = vmatpush1.msra.mxu0 0.0
    %821 = vmatprep.subr.mxu0 0.0
    %822 = vmatpush1.msra.mxu0 0.0
    %823 = vmatprep.subr.mxu0 0.0
    %824 = vmatpush1.msra.mxu0 0.0
    %825 = vmatprep.subr.mxu0 0.0
    %826 = vmatpush1.msra.mxu0 0.0
    %827 = vmatprep.subr.mxu0 0.0
    %828 = vmatpush1.msra.mxu0 0.0
    %829 = vmatprep.subr.mxu0 0.0
    %830 = vmatpush1.msra.mxu0 0.0
    %831 = vmatprep.subr.mxu0 0.0
    %832 = vmatpush1.msra.mxu0 0.0
    %833 = vmatprep.subr.mxu0 0.0
    %834 = vmatpush1.msra.mxu0 0.0
    %835 = vmatprep.subr.mxu0 0.0
    %836 = vmatpush1.msra.mxu0 0.0
    %837 = vmatprep.subr.mxu0 0.0
    %838 = vmatpush1.msra.mxu0 0.0
    %839 = vmatprep.subr.mxu0 0.0
    %840 = vmatpush1.msra.mxu0 0.0
    %841 = vmatprep.subr.mxu0 0.0
    %842 = vmatpush1.msra.mxu0 0.0
    %843 = vmatprep.subr.mxu0 0.0
    %844 = vmatpush1.msra.mxu0 0.0
    %845 = vmatprep.subr.mxu0 0.0
    %846 = vmatpush1.msra.mxu0 0.0
    %847 = vmatprep.subr.mxu0 0.0
    %848 = vmatpush1.msra.mxu0 0.0
    %849 = vmatprep.subr.mxu0 0.0
    %850 = vmatpush1.msra.mxu0 0.0
    %851 = vmatprep.subr.mxu0 0.0
    %852 = vmatpush1.msra.mxu0 0.0
    %853 = vmatprep.subr.mxu0 0.0
    %854 = vmatpush1.msra.mxu0 0.0
    %855 = vmatprep.subr.mxu0 0.0
    %856 = vmatpush1.msra.mxu0 0.0
    %857 = vmatprep.subr.mxu0 0.0
    %858 = vmatpush1.msra.mxu0 0.0
    %859 = vmatprep.subr.mxu0 0.0
    %860 = vmatpush1.msra.mxu0 0.0
    %861 = vmatprep.subr.mxu0 0.0
    %862 = vmatpush1.msra.mxu0 0.0
    %863 = vmatprep.subr.mxu0 0.0
    %864 = vmatpush1.msra.mxu0 0.0
    %865 = vmatprep.subr.mxu0 0.0
    %866 = vmatpush1.msra.mxu0 0.0
    %867 = vmatprep.subr.mxu0 0.0
    %868 = vmatpush1.msra.mxu0 0.0
    %869 = vmatprep.subr.mxu0 0.0
    %870 = vmatpush1.msra.mxu0 0.0
    %871 = vmatprep.subr.mxu0 0.0
    %872 = vmatpush1.msra.mxu0 0.0
    %873 = vmatprep.subr.mxu0 0.0
    %874 = vmatpush1.msra.mxu0 0.0
    %875 = vmatprep.subr.mxu0 0.0
    %876 = vmatpush1.msra.mxu0 0.0
    %877 = vmatprep.subr.mxu0 0.0
    %878 = vmatpush1.msra.mxu0 0.0
    %879 = vmatprep.mubr.f32.mxu0 0.0
    %880 = vmatmul.mubr.f32.gmra.mrb[0].mxu0 %v810
    %v881 = vpop.f32.mrb[0].mxu0
    %v882 = vadd.f32 0.0, %v881
    %v883 = vpop.f32.mrb[0].mxu0
    %884 = vmatprep.mubr.f32.mxu0 0.0
    %885 = vmatmul.mubr.f32.gmra.mrb[0].mxu0 %v813
    %v886 = vpop.f32.mrb[0].mxu0
    %v887 = vadd.f32 0.0, %v886
    %v888 = vpop.f32.mrb[0].mxu0
    %889 = vdwg.mxu0
    %890 = vrot.lane.b32.xlu0 %v167, 56
    %v891 = vpop.permute.xlu0 %890
    %892 = vrot.lane.b32.xlu0 %v172, 56
    %v893 = vpop.permute.xlu0 %892
    %v897 = vsel %vm358, %v800, 0
    %v900 = vsel %vm358, %v802, 0
    %902 = vmatprep.subr.mxu0 0.0
    %903 = vmatpush1.msra.mxu0 %v891
    %904 = vmatprep.subr.mxu0 0.0
    %905 = vmatpush1.msra.mxu0 %v893
    %906 = vmatprep.subr.mxu0 0.0
    %907 = vmatpush1.msra.mxu0 0.0
    %908 = vmatprep.subr.mxu0 0.0
    %909 = vmatpush1.msra.mxu0 0.0
    %910 = vmatprep.subr.mxu0 0.0
    %911 = vmatpush1.msra.mxu0 0.0
    %912 = vmatprep.subr.mxu0 0.0
    %913 = vmatpush1.msra.mxu0 0.0
    %914 = vmatprep.subr.mxu0 0.0
    %915 = vmatpush1.msra.mxu0 0.0
    %916 = vmatprep.subr.mxu0 0.0
    %917 = vmatpush1.msra.mxu0 0.0
    %918 = vmatprep.subr.mxu0 0.0
    %919 = vmatpush1.msra.mxu0 0.0
    %920 = vmatprep.subr.mxu0 0.0
    %921 = vmatpush1.msra.mxu0 0.0
    %922 = vmatprep.subr.mxu0 0.0
    %923 = vmatpush1.msra.mxu0 0.0
    %924 = vmatprep.subr.mxu0 0.0
    %925 = vmatpush1.msra.mxu0 0.0
    %926 = vmatprep.subr.mxu0 0.0
    %927 = vmatpush1.msra.mxu0 0.0
    %928 = vmatprep.subr.mxu0 0.0
    %929 = vmatpush1.msra.mxu0 0.0
    %930 = vmatprep.subr.mxu0 0.0
    %931 = vmatpush1.msra.mxu0 0.0
    %932 = vmatprep.subr.mxu0 0.0
    %933 = vmatpush1.msra.mxu0 0.0
    %934 = vmatprep.subr.mxu0 0.0
    %935 = vmatpush1.msra.mxu0 0.0
    %936 = vmatprep.subr.mxu0 0.0
    %937 = vmatpush1.msra.mxu0 0.0
    %938 = vmatprep.subr.mxu0 0.0
    %939 = vmatpush1.msra.mxu0 0.0
    %940 = vmatprep.subr.mxu0 0.0
    %941 = vmatpush1.msra.mxu0 0.0
    %942 = vmatprep.subr.mxu0 0.0
    %943 = vmatpush1.msra.mxu0 0.0
    %944 = vmatprep.subr.mxu0 0.0
    %945 = vmatpush1.msra.mxu0 0.0
    %946 = vmatprep.subr.mxu0 0.0
    %947 = vmatpush1.msra.mxu0 0.0
    %948 = vmatprep.subr.mxu0 0.0
    %949 = vmatpush1.msra.mxu0 0.0
    %950 = vmatprep.subr.mxu0 0.0
    %951 = vmatpush1.msra.mxu0 0.0
    %952 = vmatprep.subr.mxu0 0.0
    %953 = vmatpush1.msra.mxu0 0.0
    %954 = vmatprep.subr.mxu0 0.0
    %955 = vmatpush1.msra.mxu0 0.0
    %956 = vmatprep.subr.mxu0 0.0
    %957 = vmatpush1.msra.mxu0 0.0
    %958 = vmatprep.subr.mxu0 0.0
    %959 = vmatpush1.msra.mxu0 0.0
    %960 = vmatprep.subr.mxu0 0.0
    %961 = vmatpush1.msra.mxu0 0.0
    %962 = vmatprep.subr.mxu0 0.0
    %963 = vmatpush1.msra.mxu0 0.0
    %964 = vmatprep.subr.mxu0 0.0
    %965 = vmatpush1.msra.mxu0 0.0
    %966 = vmatprep.mubr.f32.mxu0 0.0
    %967 = vmatmul.mubr.f32.gmra.mrb[0].mxu0 %v897
    %v968 = vpop.f32.mrb[0].mxu0
    %v969 = vadd.f32 0.0, %v968
    %v970 = vpop.f32.mrb[0].mxu0
    %971 = vmatprep.mubr.f32.mxu0 0.0
    %972 = vmatmul.mubr.f32.gmra.mrb[0].mxu0 %v900
    %v973 = vpop.f32.mrb[0].mxu0
    %v974 = vadd.f32 0.0, %v973
    %v975 = vpop.f32.mrb[0].mxu0
    %976 = vdwg.mxu0
    %v978 = vsel %vm185, %v882, 0
    %v981 = vsel %vm185, %v887, 0
    %v984 = vsel %vm185, %v969, 0
    %v987 = vsel %vm185, %v974, 0
    %989 = vmatprep.subr.mxu0 0.0
    %990 = vmatpush1.msra.mxu0 %v176
    %991 = vmatprep.subr.mxu0 0.0
    %992 = vmatpush1.msra.mxu0 0.0
    %993 = vmatprep.subr.mxu0 0.0
    %994 = vmatpush1.msra.mxu0 0.0
    %995 = vmatprep.subr.mxu0 0.0
    %996 = vmatpush1.msra.mxu0 0.0
    %997 = vmatprep.subr.mxu0 0.0
    %998 = vmatpush1.msra.mxu0 0.0
    %999 = vmatprep.subr.mxu0 0.0
    %1000 = vmatpush1.msra.mxu0 0.0
    %1001 = vmatprep.subr.mxu0 0.0
    %1002 = vmatpush1.msra.mxu0 0.0
    %1003 = vmatprep.subr.mxu0 0.0
    %1004 = vmatpush1.msra.mxu0 0.0
    %1005 = vmatprep.subr.mxu0 0.0
    %1006 = vmatpush1.msra.mxu0 0.0
    %1007 = vmatprep.subr.mxu0 0.0
    %1008 = vmatpush1.msra.mxu0 0.0
    %1009 = vmatprep.subr.mxu0 0.0
    %1010 = vmatpush1.msra.mxu0 0.0
    %1011 = vmatprep.subr.mxu0 0.0
    %1012 = vmatpush1.msra.mxu0 0.0
    %1013 = vmatprep.subr.mxu0 0.0
    %1014 = vmatpush1.msra.mxu0 0.0
    %1015 = vmatprep.subr.mxu0 0.0
    %1016 = vmatpush1.msra.mxu0 0.0
    %1017 = vmatprep.subr.mxu0 0.0
    %1018 = vmatpush1.msra.mxu0 0.0
    %1019 = vmatprep.subr.mxu0 0.0
    %1020 = vmatpush1.msra.mxu0 0.0
    %1021 = vmatprep.subr.mxu0 0.0
    %1022 = vmatpush1.msra.mxu0 0.0
    %1023 = vmatprep.subr.mxu0 0.0
    %1024 = vmatpush1.msra.mxu0 0.0
    %1025 = vmatprep.subr.mxu0 0.0
    %1026 = vmatpush1.msra.mxu0 0.0
    %1027 = vmatprep.subr.mxu0 0.0
    %1028 = vmatpush1.msra.mxu0 0.0
    %1029 = vmatprep.subr.mxu0 0.0
    %1030 = vmatpush1.msra.mxu0 0.0
    %1031 = vmatprep.subr.mxu0 0.0
    %1032 = vmatpush1.msra.mxu0 0.0
    %1033 = vmatprep.subr.mxu0 0.0
    %1034 = vmatpush1.msra.mxu0 0.0
    %1035 = vmatprep.subr.mxu0 0.0
    %1036 = vmatpush1.msra.mxu0 0.0
    %1037 = vmatprep.subr.mxu0 0.0
    %1038 = vmatpush1.msra.mxu0 0.0
    %1039 = vmatprep.subr.mxu0 0.0
    %1040 = vmatpush1.msra.mxu0 0.0
    %1041 = vmatprep.subr.mxu0 0.0
    %1042 = vmatpush1.msra.mxu0 0.0
    %1043 = vmatprep.subr.mxu0 0.0
    %1044 = vmatpush1.msra.mxu0 0.0
    %1045 = vmatprep.subr.mxu0 0.0
    %1046 = vmatpush1.msra.mxu0 0.0
    %1047 = vmatprep.subr.mxu0 0.0
    %1048 = vmatpush1.msra.mxu0 0.0
    %1049 = vmatprep.subr.mxu0 0.0
    %1050 = vmatpush1.msra.mxu0 0.0
    %1051 = vmatprep.subr.mxu0 0.0
    %1052 = vmatpush1.msra.mxu0 0.0
    %1053 = vmatprep.mubr.f32.mxu0 0.0
    %1054 = vmatmul.mubr.f32.gmra.mrb[0].mxu0 %v978
    %v1055 = vpop.f32.mrb[0].mxu0
    %v1056 = vadd.f32 0.0, %v1055
    %v1057 = vpop.f32.mrb[0].mxu0
    %1058 = vmatprep.mubr.f32.mxu0 0.0
    %1059 = vmatmul.mubr.f32.gmra.mrb[0].mxu0 %v981
    %v1060 = vpop.f32.mrb[0].mxu0
    %v1061 = vadd.f32 0.0, %v1060
    %v1062 = vpop.f32.mrb[0].mxu0
    %1063 = vmatprep.mubr.f32.mxu0 0.0
    %1064 = vmatmul.mubr.f32.gmra.mrb[0].mxu0 %v984
    %v1065 = vpop.f32.mrb[0].mxu0
    %v1066 = vadd.f32 0.0, %v1065
    %v1067 = vpop.f32.mrb[0].mxu0
    %1068 = vmatprep.mubr.f32.mxu0 0.0
    %1069 = vmatmul.mubr.f32.gmra.mrb[0].mxu0 %v987
    %v1070 = vpop.f32.mrb[0].mxu0
    %v1071 = vadd.f32 0.0, %v1070
    %v1072 = vpop.f32.mrb[0].mxu0
    %1073 = vdwg.mxu0
    %v1075 = vsel %vm185, %v482, 0
    %v1078 = vsel %vm185, %v487, 0
    %v1081 = vsel %vm185, %v569, 0
    %v1084 = vsel %vm185, %v574, 0
    %1086 = vmatprep.subr.mxu0 0.0
    %1087 = vmatpush1.msra.mxu0 %v175
    %1088 = vmatprep.subr.mxu0 0.0
    %1089 = vmatpush1.msra.mxu0 0.0
    %1090 = vmatprep.subr.mxu0 0.0
    %1091 = vmatpush1.msra.mxu0 0.0
    %1092 = vmatprep.subr.mxu0 0.0
    %1093 = vmatpush1.msra.mxu0 0.0
    %1094 = vmatprep.subr.mxu0 0.0
    %1095 = vmatpush1.msra.mxu0 0.0
    %1096 = vmatprep.subr.mxu0 0.0
    %1097 = vmatpush1.msra.mxu0 0.0
    %1098 = vmatprep.subr.mxu0 0.0
    %1099 = vmatpush1.msra.mxu0 0.0
    %1100 = vmatprep.subr.mxu0 0.0
    %1101 = vmatpush1.msra.mxu0 0.0
    %1102 = vmatprep.subr.mxu0 0.0
    %1103 = vmatpush1.msra.mxu0 0.0
    %1104 = vmatprep.subr.mxu0 0.0
    %1105 = vmatpush1.msra.mxu0 0.0
    %1106 = vmatprep.subr.mxu0 0.0
    %1107 = vmatpush1.msra.mxu0 0.0
    %1108 = vmatprep.subr.mxu0 0.0
    %1109 = vmatpush1.msra.mxu0 0.0
    %1110 = vmatprep.subr.mxu0 0.0
    %1111 = vmatpush1.msra.mxu0 0.0
    %1112 = vmatprep.subr.mxu0 0.0
    %1113 = vmatpush1.msra.mxu0 0.0
    %1114 = vmatprep.subr.mxu0 0.0
    %1115 = vmatpush1.msra.mxu0 0.0
    %1116 = vmatprep.subr.mxu0 0.0
    %1117 = vmatpush1.msra.mxu0 0.0
    %1118 = vmatprep.subr.mxu0 0.0
    %1119 = vmatpush1.msra.mxu0 0.0
    %1120 = vmatprep.subr.mxu0 0.0
    %1121 = vmatpush1.msra.mxu0 0.0
    %1122 = vmatprep.subr.mxu0 0.0
    %1123 = vmatpush1.msra.mxu0 0.0
    %1124 = vmatprep.subr.mxu0 0.0
    %1125 = vmatpush1.msra.mxu0 0.0
    %1126 = vmatprep.subr.mxu0 0.0
    %1127 = vmatpush1.msra.mxu0 0.0
    %1128 = vmatprep.subr.mxu0 0.0
    %1129 = vmatpush1.msra.mxu0 0.0
    %1130 = vmatprep.subr.mxu0 0.0
    %1131 = vmatpush1.msra.mxu0 0.0
    %1132 = vmatprep.subr.mxu0 0.0
    %1133 = vmatpush1.msra.mxu0 0.0
    %1134 = vmatprep.subr.mxu0 0.0
    %1135 = vmatpush1.msra.mxu0 0.0
    %1136 = vmatprep.subr.mxu0 0.0
    %1137 = vmatpush1.msra.mxu0 0.0
    %1138 = vmatprep.subr.mxu0 0.0
    %1139 = vmatpush1.msra.mxu0 0.0
    %1140 = vmatprep.subr.mxu0 0.0
    %1141 = vmatpush1.msra.mxu0 0.0
    %1142 = vmatprep.subr.mxu0 0.0
    %1143 = vmatpush1.msra.mxu0 0.0
    %1144 = vmatprep.subr.mxu0 0.0
    %1145 = vmatpush1.msra.mxu0 0.0
    %1146 = vmatprep.subr.mxu0 0.0
    %1147 = vmatpush1.msra.mxu0 0.0
    %1148 = vmatprep.subr.mxu0 0.0
    %1149 = vmatpush1.msra.mxu0 0.0
    %1150 = vmatprep.mubr.f32.mxu0 0.0
    %1151 = vmatmul.mubr.f32.gmra.mrb[0].mxu0 %v1075
    %v1152 = vpop.f32.mrb[0].mxu0
    %v1153 = vadd.f32 %v1056, %v1152
    %v1154 = vpop.f32.mrb[0].mxu0
    %1155 = vmatprep.mubr.f32.mxu0 0.0
    %1156 = vmatmul.mubr.f32.gmra.mrb[0].mxu0 %v1078
    %v1157 = vpop.f32.mrb[0].mxu0
    %v1158 = vadd.f32 %v1061, %v1157
    %v1159 = vpop.f32.mrb[0].mxu0
    %1160 = vmatprep.mubr.f32.mxu0 0.0
    %1161 = vmatmul.mubr.f32.gmra.mrb[0].mxu0 %v1081
    %v1162 = vpop.f32.mrb[0].mxu0
    %v1163 = vadd.f32 %v1066, %v1162
    %v1164 = vpop.f32.mrb[0].mxu0
    %1165 = vmatprep.mubr.f32.mxu0 0.0
    %1166 = vmatmul.mubr.f32.gmra.mrb[0].mxu0 %v1084
    %v1167 = vpop.f32.mrb[0].mxu0
    %v1168 = vadd.f32 %v1071, %v1167
    %v1169 = vpop.f32.mrb[0].mxu0
    %1170 = vdwg.mxu0
    %1171 = vrot.lane.b32.xlu0 %v157, 112
    %v1172 = vpop.permute.xlu0 %1171
    %1173 = vrot.lane.b32.xlu0 %v162, 112
    %v1174 = vpop.permute.xlu0 %1173
    %1175 = vrot.lane.b32.xlu0 %v157, 80
    %v1176 = vpop.permute.xlu0 %1175
    %1177 = vrot.lane.b32.xlu0 %v162, 80
    %v1178 = vpop.permute.xlu0 %1177
    %v1179 = vsel %vm185, %v1172, 0
    %v1181 = vsel %vm185, %v1174, 0
    %v1183 = vsel %vm185, %v1176, 0
    %v1185 = vsel %vm185, %v1178, 0
    %1187 = vmatprep.subr.mxu0 0.0
    %1188 = vmatpush1.xpose.msra.mxu0 %v1183
    %1189 = vmatprep.subr.mxu0 0.0
    %1190 = vmatpush1.xpose.msra.mxu0 %v1185
    %1191 = vmatprep.subr.mxu0 0.0
    %1192 = vmatpush1.xpose.msra.mxu0 0.0
    %1193 = vmatprep.subr.mxu0 0.0
    %1194 = vmatpush1.xpose.msra.mxu0 0.0
    %1195 = vmatprep.subr.mxu0 0.0
    %1196 = vmatpush1.xpose.msra.mxu0 0.0
    %1197 = vmatprep.subr.mxu0 0.0
    %1198 = vmatpush1.xpose.msra.mxu0 0.0
    %1199 = vmatprep.subr.mxu0 0.0
    %1200 = vmatpush1.xpose.msra.mxu0 0.0
    %1201 = vmatprep.subr.mxu0 0.0
    %1202 = vmatpush1.xpose.msra.mxu0 0.0
    %1203 = vmatprep.subr.mxu0 0.0
    %1204 = vmatpush1.xpose.msra.mxu0 0.0
    %1205 = vmatprep.subr.mxu0 0.0
    %1206 = vmatpush1.xpose.msra.mxu0 0.0
    %1207 = vmatprep.subr.mxu0 0.0
    %1208 = vmatpush1.xpose.msra.mxu0 0.0
    %1209 = vmatprep.subr.mxu0 0.0
    %1210 = vmatpush1.xpose.msra.mxu0 0.0
    %1211 = vmatprep.subr.mxu0 0.0
    %1212 = vmatpush1.xpose.msra.mxu0 0.0
    %1213 = vmatprep.subr.mxu0 0.0
    %1214 = vmatpush1.xpose.msra.mxu0 0.0
    %1215 = vmatprep.subr.mxu0 0.0
    %1216 = vmatpush1.xpose.msra.mxu0 0.0
    %1217 = vmatprep.subr.mxu0 0.0
    %1218 = vmatpush1.xpose.msra.mxu0 0.0
    %1219 = vmatprep.subr.mxu0 0.0
    %1220 = vmatpush1.xpose.msra.mxu0 0.0
    %1221 = vmatprep.subr.mxu0 0.0
    %1222 = vmatpush1.xpose.msra.mxu0 0.0
    %1223 = vmatprep.subr.mxu0 0.0
    %1224 = vmatpush1.xpose.msra.mxu0 0.0
    %1225 = vmatprep.subr.mxu0 0.0
    %1226 = vmatpush1.xpose.msra.mxu0 0.0
    %1227 = vmatprep.subr.mxu0 0.0
    %1228 = vmatpush1.xpose.msra.mxu0 0.0
    %1229 = vmatprep.subr.mxu0 0.0
    %1230 = vmatpush1.xpose.msra.mxu0 0.0
    %1231 = vmatprep.subr.mxu0 0.0
    %1232 = vmatpush1.xpose.msra.mxu0 0.0
    %1233 = vmatprep.subr.mxu0 0.0
    %1234 = vmatpush1.xpose.msra.mxu0 0.0
    %1235 = vmatprep.subr.mxu0 0.0
    %1236 = vmatpush1.xpose.msra.mxu0 0.0
    %1237 = vmatprep.subr.mxu0 0.0
    %1238 = vmatpush1.xpose.msra.mxu0 0.0
    %1239 = vmatprep.subr.mxu0 0.0
    %1240 = vmatpush1.xpose.msra.mxu0 0.0
    %1241 = vmatprep.subr.mxu0 0.0
    %1242 = vmatpush1.xpose.msra.mxu0 0.0
    %1243 = vmatprep.subr.mxu0 0.0
    %1244 = vmatpush1.xpose.msra.mxu0 0.0
    %1245 = vmatprep.subr.mxu0 0.0
    %1246 = vmatpush1.xpose.msra.mxu0 0.0
    %1247 = vmatprep.subr.mxu0 0.0
    %1248 = vmatpush1.xpose.msra.mxu0 0.0
    %1249 = vmatprep.subr.mxu0 0.0
    %1250 = vmatpush1.xpose.msra.mxu0 0.0
    %1251 = vmatprep.mubr.f32.mxu0 0.0
    %1252 = vmatmul.mubr.f32.gmra.mrb[0].mxu0 %v1179
    %v1253 = vpop.f32.mrb[0].mxu0
    %v1254 = vadd.f32 0.0, %v1253
    %v1255 = vpop.f32.mrb[0].mxu0
    %1256 = vmatprep.mubr.f32.mxu0 0.0
    %1257 = vmatmul.mubr.f32.gmra.mrb[0].mxu0 %v1181
    %v1258 = vpop.f32.mrb[0].mxu0
    %v1259 = vadd.f32 0.0, %v1258
    %v1260 = vpop.f32.mrb[0].mxu0
    %1261 = vdwg.mxu0
    %1262 = vrot.lane.b32.xlu0 %v167, 112
    %v1263 = vpop.permute.xlu0 %1262
    %1264 = vrot.lane.b32.xlu0 %v172, 112
    %v1265 = vpop.permute.xlu0 %1264
    %1266 = vrot.lane.b32.xlu0 %v167, 80
    %v1267 = vpop.permute.xlu0 %1266
    %1268 = vrot.lane.b32.xlu0 %v172, 80
    %v1269 = vpop.permute.xlu0 %1268
    %v1270 = vsel %vm185, %v1263, 0
    %v1272 = vsel %vm185, %v1265, 0
    %v1274 = vsel %vm185, %v1267, 0
    %v1276 = vsel %vm185, %v1269, 0
    %1278 = vmatprep.subr.mxu0 0.0
    %1279 = vmatpush1.xpose.msra.mxu0 %v1274
    %1280 = vmatprep.subr.mxu0 0.0
    %1281 = vmatpush1.xpose.msra.mxu0 %v1276
    %1282 = vmatprep.subr.mxu0 0.0
    %1283 = vmatpush1.xpose.msra.mxu0 0.0
    %1284 = vmatprep.subr.mxu0 0.0
    %1285 = vmatpush1.xpose.msra.mxu0 0.0
    %1286 = vmatprep.subr.mxu0 0.0
    %1287 = vmatpush1.xpose.msra.mxu0 0.0
    %1288 = vmatprep.subr.mxu0 0.0
    %1289 = vmatpush1.xpose.msra.mxu0 0.0
    %1290 = vmatprep.subr.mxu0 0.0
    %1291 = vmatpush1.xpose.msra.mxu0 0.0
    %1292 = vmatprep.subr.mxu0 0.0
    %1293 = vmatpush1.xpose.msra.mxu0 0.0
    %1294 = vmatprep.subr.mxu0 0.0
    %1295 = vmatpush1.xpose.msra.mxu0 0.0
    %1296 = vmatprep.subr.mxu0 0.0
    %1297 = vmatpush1.xpose.msra.mxu0 0.0
    %1298 = vmatprep.subr.mxu0 0.0
    %1299 = vmatpush1.xpose.msra.mxu0 0.0
    %1300 = vmatprep.subr.mxu0 0.0
    %1301 = vmatpush1.xpose.msra.mxu0 0.0
    %1302 = vmatprep.subr.mxu0 0.0
    %1303 = vmatpush1.xpose.msra.mxu0 0.0
    %1304 = vmatprep.subr.mxu0 0.0
    %1305 = vmatpush1.xpose.msra.mxu0 0.0
    %1306 = vmatprep.subr.mxu0 0.0
    %1307 = vmatpush1.xpose.msra.mxu0 0.0
    %1308 = vmatprep.subr.mxu0 0.0
    %1309 = vmatpush1.xpose.msra.mxu0 0.0
    %1310 = vmatprep.subr.mxu0 0.0
    %1311 = vmatpush1.xpose.msra.mxu0 0.0
    %1312 = vmatprep.subr.mxu0 0.0
    %1313 = vmatpush1.xpose.msra.mxu0 0.0
    %1314 = vmatprep.subr.mxu0 0.0
    %1315 = vmatpush1.xpose.msra.mxu0 0.0
    %1316 = vmatprep.subr.mxu0 0.0
    %1317 = vmatpush1.xpose.msra.mxu0 0.0
    %1318 = vmatprep.subr.mxu0 0.0
    %1319 = vmatpush1.xpose.msra.mxu0 0.0
    %1320 = vmatprep.subr.mxu0 0.0
    %1321 = vmatpush1.xpose.msra.mxu0 0.0
    %1322 = vmatprep.subr.mxu0 0.0
    %1323 = vmatpush1.xpose.msra.mxu0 0.0
    %1324 = vmatprep.subr.mxu0 0.0
    %1325 = vmatpush1.xpose.msra.mxu0 0.0
    %1326 = vmatprep.subr.mxu0 0.0
    %1327 = vmatpush1.xpose.msra.mxu0 0.0
    %1328 = vmatprep.subr.mxu0 0.0
    %1329 = vmatpush1.xpose.msra.mxu0 0.0
    %1330 = vmatprep.subr.mxu0 0.0
    %1331 = vmatpush1.xpose.msra.mxu0 0.0
    %1332 = vmatprep.subr.mxu0 0.0
    %1333 = vmatpush1.xpose.msra.mxu0 0.0
    %1334 = vmatprep.subr.mxu0 0.0
    %1335 = vmatpush1.xpose.msra.mxu0 0.0
    %1336 = vmatprep.subr.mxu0 0.0
    %1337 = vmatpush1.xpose.msra.mxu0 0.0
    %1338 = vmatprep.subr.mxu0 0.0
    %1339 = vmatpush1.xpose.msra.mxu0 0.0
    %1340 = vmatprep.subr.mxu0 0.0
    %1341 = vmatpush1.xpose.msra.mxu0 0.0
    %1342 = vmatprep.mubr.f32.mxu0 0.0
    %1343 = vmatmul.mubr.f32.gmra.mrb[0].mxu0 %v1270
    %v1344 = vpop.f32.mrb[0].mxu0
    %v1345 = vadd.f32 0.0, %v1344
    %v1346 = vpop.f32.mrb[0].mxu0
    %1347 = vmatprep.mubr.f32.mxu0 0.0
    %1348 = vmatmul.mubr.f32.gmra.mrb[0].mxu0 %v1272
    %v1349 = vpop.f32.mrb[0].mxu0
    %v1350 = vadd.f32 0.0, %v1349
    %v1351 = vpop.f32.mrb[0].mxu0
    %1352 = vdwg.mxu0
    %v1353 = vsel %vm358, %v1254, -inf
    %1354 = vmax.xlane.f32.xlu0 %v1353
    %v1355 = vpop.xlane.xlu0 %1354
    %v1356 = vsel %vm358, %v1259, -inf
    %1357 = vmax.xlane.f32.xlu0 %v1356
    %v1358 = vpop.xlane.xlu0 %1357
    %v1359 = vsel %vm358, %v1345, -inf
    %1360 = vmax.xlane.f32.xlu0 %v1359
    %v1361 = vpop.xlane.xlu0 %1360
    %v1362 = vsel %vm358, %v1350, -inf
    %1363 = vmax.xlane.f32.xlu0 %v1362
    %v1364 = vpop.xlane.xlu0 %1363
    %v1365 = vsub.f32 %v1254, %v1355
    %v1366 = vsub.f32 %v1259, %v1358
    %v1367 = vsub.f32 %v1345, %v1361
    %v1368 = vsub.f32 %v1350, %v1364
    %v1369 = vmul.f32 %v1365, 1.442695
    %v1370 = vpow.pop %v1369
    %v1371 = vmul.f32 %v1366, 1.442695
    %v1372 = vpow.pop %v1371
    %v1373 = vmul.f32 %v1367, 1.442695
    %v1374 = vpow.pop %v1373
    %v1375 = vmul.f32 %v1368, 1.442695
    %v1376 = vpow.pop %v1375
    %v1377 = vsel %vm358, %v1370, 0.0
    %1378 = vadd.xlane.f32.xlu0 %v1377
    %v1379 = vpop.xlane.xlu0 %1378
    %v1380 = vsel %vm358, %v1372, 0.0
    %1381 = vadd.xlane.f32.xlu0 %v1380
    %v1382 = vpop.xlane.xlu0 %1381
    %v1383 = vsel %vm358, %v1374, 0.0
    %1384 = vadd.xlane.f32.xlu0 %v1383
    %v1385 = vpop.xlane.xlu0 %1384
    %v1386 = vsel %vm358, %v1376, 0.0
    %1387 = vadd.xlane.f32.xlu0 %v1386
    %v1388 = vpop.xlane.xlu0 %1387
    %v1389 = vrcp.pop %v1379
    %v1390 = vmul.f32 %v1370, %v1389
    %v1391 = vrcp.pop %v1382
    %v1392 = vmul.f32 %v1372, %v1391
    %v1393 = vrcp.pop %v1385
    %v1394 = vmul.f32 %v1374, %v1393
    %v1395 = vrcp.pop %v1388
    %v1396 = vmul.f32 %v1376, %v1395
    %1397 = vrot.lane.b32.xlu0 %v157, 48
    %v1398 = vpop.permute.xlu0 %1397
    %1399 = vrot.lane.b32.xlu0 %v162, 48
    %v1400 = vpop.permute.xlu0 %1399
    %v1404 = vsel %vm358, %v1390, 0
    %v1407 = vsel %vm358, %v1392, 0
    %1409 = vmatprep.subr.mxu0 0.0
    %1410 = vmatpush1.msra.mxu0 %v1398
    %1411 = vmatprep.subr.mxu0 0.0
    %1412 = vmatpush1.msra.mxu0 %v1400
    %1413 = vmatprep.subr.mxu0 0.0
    %1414 = vmatpush1.msra.mxu0 0.0
    %1415 = vmatprep.subr.mxu0 0.0
    %1416 = vmatpush1.msra.mxu0 0.0
    %1417 = vmatprep.subr.mxu0 0.0
    %1418 = vmatpush1.msra.mxu0 0.0
    %1419 = vmatprep.subr.mxu0 0.0
    %1420 = vmatpush1.msra.mxu0 0.0
    %1421 = vmatprep.subr.mxu0 0.0
    %1422 = vmatpush1.msra.mxu0 0.0
    %1423 = vmatprep.subr.mxu0 0.0
    %1424 = vmatpush1.msra.mxu0 0.0
    %1425 = vmatprep.subr.mxu0 0.0
    %1426 = vmatpush1.msra.mxu0 0.0
    %1427 = vmatprep.subr.mxu0 0.0
    %1428 = vmatpush1.msra.mxu0 0.0
    %1429 = vmatprep.subr.mxu0 0.0
    %1430 = vmatpush1.msra.mxu0 0.0
    %1431 = vmatprep.subr.mxu0 0.0
    %1432 = vmatpush1.msra.mxu0 0.0
    %1433 = vmatprep.subr.mxu0 0.0
    %1434 = vmatpush1.msra.mxu0 0.0
    %1435 = vmatprep.subr.mxu0 0.0
    %1436 = vmatpush1.msra.mxu0 0.0
    %1437 = vmatprep.subr.mxu0 0.0
    %1438 = vmatpush1.msra.mxu0 0.0
    %1439 = vmatprep.subr.mxu0 0.0
    %1440 = vmatpush1.msra.mxu0 0.0
    %1441 = vmatprep.subr.mxu0 0.0
    %1442 = vmatpush1.msra.mxu0 0.0
    %1443 = vmatprep.subr.mxu0 0.0
    %1444 = vmatpush1.msra.mxu0 0.0
    %1445 = vmatprep.subr.mxu0 0.0
    %1446 = vmatpush1.msra.mxu0 0.0
    %1447 = vmatprep.subr.mxu0 0.0
    %1448 = vmatpush1.msra.mxu0 0.0
    %1449 = vmatprep.subr.mxu0 0.0
    %1450 = vmatpush1.msra.mxu0 0.0
    %1451 = vmatprep.subr.mxu0 0.0
    %1452 = vmatpush1.msra.mxu0 0.0
    %1453 = vmatprep.subr.mxu0 0.0
    %1454 = vmatpush1.msra.mxu0 0.0
    %1455 = vmatprep.subr.mxu0 0.0
    %1456 = vmatpush1.msra.mxu0 0.0
    %1457 = vmatprep.subr.mxu0 0.0
    %1458 = vmatpush1.msra.mxu0 0.0
    %1459 = vmatprep.subr.mxu0 0.0
    %1460 = vmatpush1.msra.mxu0 0.0
    %1461 = vmatprep.subr.mxu0 0.0
    %1462 = vmatpush1.msra.mxu0 0.0
    %1463 = vmatprep.subr.mxu0 0.0
    %1464 = vmatpush1.msra.mxu0 0.0
    %1465 = vmatprep.subr.mxu0 0.0
    %1466 = vmatpush1.msra.mxu0 0.0
    %1467 = vmatprep.subr.mxu0 0.0
    %1468 = vmatpush1.msra.mxu0 0.0
    %1469 = vmatprep.subr.mxu0 0.0
    %1470 = vmatpush1.msra.mxu0 0.0
    %1471 = vmatprep.subr.mxu0 0.0
    %1472 = vmatpush1.msra.mxu0 0.0
    %1473 = vmatprep.mubr.f32.mxu0 0.0
    %1474 = vmatmul.mubr.f32.gmra.mrb[0].mxu0 %v1404
    %v1475 = vpop.f32.mrb[0].mxu0
    %v1476 = vadd.f32 0.0, %v1475
    %v1477 = vpop.f32.mrb[0].mxu0
    %1478 = vmatprep.mubr.f32.mxu0 0.0
    %1479 = vmatmul.mubr.f32.gmra.mrb[0].mxu0 %v1407
    %v1480 = vpop.f32.mrb[0].mxu0
    %v1481 = vadd.f32 0.0, %v1480
    %v1482 = vpop.f32.mrb[0].mxu0
    %1483 = vdwg.mxu0
    %1484 = vrot.lane.b32.xlu0 %v167, 48
    %v1485 = vpop.permute.xlu0 %1484
    %1486 = vrot.lane.b32.xlu0 %v172, 48
    %v1487 = vpop.permute.xlu0 %1486
    %v1491 = vsel %vm358, %v1394, 0
    %v1494 = vsel %vm358, %v1396, 0
    %1496 = vmatprep.subr.mxu0 0.0
    %1497 = vmatpush1.msra.mxu0 %v1485
    %1498 = vmatprep.subr.mxu0 0.0
    %1499 = vmatpush1.msra.mxu0 %v1487
    %1500 = vmatprep.subr.mxu0 0.0
    %1501 = vmatpush1.msra.mxu0 0.0
    %1502 = vmatprep.subr.mxu0 0.0
    %1503 = vmatpush1.msra.mxu0 0.0
    %1504 = vmatprep.subr.mxu0 0.0
    %1505 = vmatpush1.msra.mxu0 0.0
    %1506 = vmatprep.subr.mxu0 0.0
    %1507 = vmatpush1.msra.mxu0 0.0
    %1508 = vmatprep.subr.mxu0 0.0
    %1509 = vmatpush1.msra.mxu0 0.0
    %1510 = vmatprep.subr.mxu0 0.0
    %1511 = vmatpush1.msra.mxu0 0.0
    %1512 = vmatprep.subr.mxu0 0.0
    %1513 = vmatpush1.msra.mxu0 0.0
    %1514 = vmatprep.subr.mxu0 0.0
    %1515 = vmatpush1.msra.mxu0 0.0
    %1516 = vmatprep.subr.mxu0 0.0
    %1517 = vmatpush1.msra.mxu0 0.0
    %1518 = vmatprep.subr.mxu0 0.0
    %1519 = vmatpush1.msra.mxu0 0.0
    %1520 = vmatprep.subr.mxu0 0.0
    %1521 = vmatpush1.msra.mxu0 0.0
    %1522 = vmatprep.subr.mxu0 0.0
    %1523 = vmatpush1.msra.mxu0 0.0
    %1524 = vmatprep.subr.mxu0 0.0
    %1525 = vmatpush1.msra.mxu0 0.0
    %1526 = vmatprep.subr.mxu0 0.0
    %1527 = vmatpush1.msra.mxu0 0.0
    %1528 = vmatprep.subr.mxu0 0.0
    %1529 = vmatpush1.msra.mxu0 0.0
    %1530 = vmatprep.subr.mxu0 0.0
    %1531 = vmatpush1.msra.mxu0 0.0
    %1532 = vmatprep.subr.mxu0 0.0
    %1533 = vmatpush1.msra.mxu0 0.0
    %1534 = vmatprep.subr.mxu0 0.0
    %1535 = vmatpush1.msra.mxu0 0.0
    %1536 = vmatprep.subr.mxu0 0.0
    %1537 = vmatpush1.msra.mxu0 0.0
    %1538 = vmatprep.subr.mxu0 0.0
    %1539 = vmatpush1.msra.mxu0 0.0
    %1540 = vmatprep.subr.mxu0 0.0
    %1541 = vmatpush1.msra.mxu0 0.0
    %1542 = vmatprep.subr.mxu0 0.0
    %1543 = vmatpush1.msra.mxu0 0.0
    %1544 = vmatprep.subr.mxu0 0.0
    %1545 = vmatpush1.msra.mxu0 0.0
    %1546 = vmatprep.subr.mxu0 0.0
    %1547 = vmatpush1.msra.mxu0 0.0
    %1548 = vmatprep.subr.mxu0 0.0
    %1549 = vmatpush1.msra.mxu0 0.0
    %1550 = vmatprep.subr.mxu0 0.0
    %1551 = vmatpush1.msra.mxu0 0.0
    %1552 = vmatprep.subr.mxu0 0.0
    %1553 = vmatpush1.msra.mxu0 0.0
    %1554 = vmatprep.subr.mxu0 0.0
    %1555 = vmatpush1.msra.mxu0 0.0
    %1556 = vmatprep.subr.mxu0 0.0
    %1557 = vmatpush1.msra.mxu0 0.0
    %1558 = vmatprep.subr.mxu0 0.0
    %1559 = vmatpush1.msra.mxu0 0.0
    %1560 = vmatprep.mubr.f32.mxu0 0.0
    %1561 = vmatmul.mubr.f32.gmra.mrb[0].mxu0 %v1491
    %v1562 = vpop.f32.mrb[0].mxu0
    %v1563 = vadd.f32 0.0, %v1562
    %v1564 = vpop.f32.mrb[0].mxu0
    %1565 = vmatprep.mubr.f32.mxu0 0.0
    %1566 = vmatmul.mubr.f32.gmra.mrb[0].mxu0 %v1494
    %v1567 = vpop.f32.mrb[0].mxu0
    %v1568 = vadd.f32 0.0, %v1567
    %v1569 = vpop.f32.mrb[0].mxu0
    %1570 = vdwg.mxu0
    %v1572 = vsel %vm185, %v1476, 0
    %v1575 = vsel %vm185, %v1481, 0
    %v1578 = vsel %vm185, %v1563, 0
    %v1581 = vsel %vm185, %v1568, 0
    %1583 = vmatprep.subr.mxu0 0.0
    %1584 = vmatpush1.msra.mxu0 %v177
    %1585 = vmatprep.subr.mxu0 0.0
    %1586 = vmatpush1.msra.mxu0 0.0
    %1587 = vmatprep.subr.mxu0 0.0
    %1588 = vmatpush1.msra.mxu0 0.0
    %1589 = vmatprep.subr.mxu0 0.0
    %1590 = vmatpush1.msra.mxu0 0.0
    %1591 = vmatprep.subr.mxu0 0.0
    %1592 = vmatpush1.msra.mxu0 0.0
    %1593 = vmatprep.subr.mxu0 0.0
    %1594 = vmatpush1.msra.mxu0 0.0
    %1595 = vmatprep.subr.mxu0 0.0
    %1596 = vmatpush1.msra.mxu0 0.0
    %1597 = vmatprep.subr.mxu0 0.0
    %1598 = vmatpush1.msra.mxu0 0.0
    %1599 = vmatprep.subr.mxu0 0.0
    %1600 = vmatpush1.msra.mxu0 0.0
    %1601 = vmatprep.subr.mxu0 0.0
    %1602 = vmatpush1.msra.mxu0 0.0
    %1603 = vmatprep.subr.mxu0 0.0
    %1604 = vmatpush1.msra.mxu0 0.0
    %1605 = vmatprep.subr.mxu0 0.0
    %1606 = vmatpush1.msra.mxu0 0.0
    %1607 = vmatprep.subr.mxu0 0.0
    %1608 = vmatpush1.msra.mxu0 0.0
    %1609 = vmatprep.subr.mxu0 0.0
    %1610 = vmatpush1.msra.mxu0 0.0
    %1611 = vmatprep.subr.mxu0 0.0
    %1612 = vmatpush1.msra.mxu0 0.0
    %1613 = vmatprep.subr.mxu0 0.0
    %1614 = vmatpush1.msra.mxu0 0.0
    %1615 = vmatprep.subr.mxu0 0.0
    %1616 = vmatpush1.msra.mxu0 0.0
    %1617 = vmatprep.subr.mxu0 0.0
    %1618 = vmatpush1.msra.mxu0 0.0
    %1619 = vmatprep.subr.mxu0 0.0
    %1620 = vmatpush1.msra.mxu0 0.0
    %1621 = vmatprep.subr.mxu0 0.0
    %1622 = vmatpush1.msra.mxu0 0.0
    %1623 = vmatprep.subr.mxu0 0.0
    %1624 = vmatpush1.msra.mxu0 0.0
    %1625 = vmatprep.subr.mxu0 0.0
    %1626 = vmatpush1.msra.mxu0 0.0
    %1627 = vmatprep.subr.mxu0 0.0
    %1628 = vmatpush1.msra.mxu0 0.0
    %1629 = vmatprep.subr.mxu0 0.0
    %1630 = vmatpush1.msra.mxu0 0.0
    %1631 = vmatprep.subr.mxu0 0.0
    %1632 = vmatpush1.msra.mxu0 0.0
    %1633 = vmatprep.subr.mxu0 0.0
    %1634 = vmatpush1.msra.mxu0 0.0
    %1635 = vmatprep.subr.mxu0 0.0
    %1636 = vmatpush1.msra.mxu0 0.0
    %1637 = vmatprep.subr.mxu0 0.0
    %1638 = vmatpush1.msra.mxu0 0.0
    %1639 = vmatprep.subr.mxu0 0.0
    %1640 = vmatpush1.msra.mxu0 0.0
    %1641 = vmatprep.subr.mxu0 0.0
    %1642 = vmatpush1.msra.mxu0 0.0
    %1643 = vmatprep.subr.mxu0 0.0
    %1644 = vmatpush1.msra.mxu0 0.0
    %1645 = vmatprep.subr.mxu0 0.0
    %1646 = vmatpush1.msra.mxu0 0.0
    %1647 = vmatprep.mubr.f32.mxu0 0.0
    %1648 = vmatmul.mubr.f32.gmra.mrb[0].mxu0 %v1572
    %v1649 = vpop.f32.mrb[0].mxu0
    %v1650 = vadd.f32 0.0, %v1649
    %v1651 = vpop.f32.mrb[0].mxu0
    %1652 = vmatprep.mubr.f32.mxu0 0.0
    %1653 = vmatmul.mubr.f32.gmra.mrb[0].mxu0 %v1575
    %v1654 = vpop.f32.mrb[0].mxu0
    %v1655 = vadd.f32 0.0, %v1654
    %v1656 = vpop.f32.mrb[0].mxu0
    %1657 = vmatprep.mubr.f32.mxu0 0.0
    %1658 = vmatmul.mubr.f32.gmra.mrb[0].mxu0 %v1578
    %v1659 = vpop.f32.mrb[0].mxu0
    %v1660 = vadd.f32 0.0, %v1659
    %v1661 = vpop.f32.mrb[0].mxu0
    %1662 = vmatprep.mubr.f32.mxu0 0.0
    %1663 = vmatmul.mubr.f32.gmra.mrb[0].mxu0 %v1581
    %v1664 = vpop.f32.mrb[0].mxu0
    %v1665 = vadd.f32 0.0, %v1664
    %v1666 = vpop.f32.mrb[0].mxu0
    %1667 = vdwg.mxu0
    %v1668 = vadd.f32 %v1153, %v1650
    %v1669 = vadd.f32 %v1158, %v1655
    %v1670 = vadd.f32 %v1163, %v1660
    %v1671 = vadd.f32 %v1168, %v1665
    %1672 = vrot.lane.b32.xlu0 %v157, 104
    %v1673 = vpop.permute.xlu0 %1672
    %1674 = vrot.lane.b32.xlu0 %v162, 104
    %v1675 = vpop.permute.xlu0 %1674
    %1676 = vrot.lane.b32.xlu0 %v157, 72
    %v1677 = vpop.permute.xlu0 %1676
    %1678 = vrot.lane.b32.xlu0 %v162, 72
    %v1679 = vpop.permute.xlu0 %1678
    %v1680 = vsel %vm185, %v1673, 0
    %v1682 = vsel %vm185, %v1675, 0
    %v1684 = vsel %vm185, %v1677, 0
    %v1686 = vsel %vm185, %v1679, 0
    %1688 = vmatprep.subr.mxu0 0.0
    %1689 = vmatpush1.xpose.msra.mxu0 %v1684
    %1690 = vmatprep.subr.mxu0 0.0
    %1691 = vmatpush1.xpose.msra.mxu0 %v1686
    %1692 = vmatprep.subr.mxu0 0.0
    %1693 = vmatpush1.xpose.msra.mxu0 0.0
    %1694 = vmatprep.subr.mxu0 0.0
    %1695 = vmatpush1.xpose.msra.mxu0 0.0
    %1696 = vmatprep.subr.mxu0 0.0
    %1697 = vmatpush1.xpose.msra.mxu0 0.0
    %1698 = vmatprep.subr.mxu0 0.0
    %1699 = vmatpush1.xpose.msra.mxu0 0.0
    %1700 = vmatprep.subr.mxu0 0.0
    %1701 = vmatpush1.xpose.msra.mxu0 0.0
    %1702 = vmatprep.subr.mxu0 0.0
    %1703 = vmatpush1.xpose.msra.mxu0 0.0
    %1704 = vmatprep.subr.mxu0 0.0
    %1705 = vmatpush1.xpose.msra.mxu0 0.0
    %1706 = vmatprep.subr.mxu0 0.0
    %1707 = vmatpush1.xpose.msra.mxu0 0.0
    %1708 = vmatprep.subr.mxu0 0.0
    %1709 = vmatpush1.xpose.msra.mxu0 0.0
    %1710 = vmatprep.subr.mxu0 0.0
    %1711 = vmatpush1.xpose.msra.mxu0 0.0
    %1712 = vmatprep.subr.mxu0 0.0
    %1713 = vmatpush1.xpose.msra.mxu0 0.0
    %1714 = vmatprep.subr.mxu0 0.0
    %1715 = vmatpush1.xpose.msra.mxu0 0.0
    %1716 = vmatprep.subr.mxu0 0.0
    %1717 = vmatpush1.xpose.msra.mxu0 0.0
    %1718 = vmatprep.subr.mxu0 0.0
    %1719 = vmatpush1.xpose.msra.mxu0 0.0
    %1720 = vmatprep.subr.mxu0 0.0
    %1721 = vmatpush1.xpose.msra.mxu0 0.0
    %1722 = vmatprep.subr.mxu0 0.0
    %1723 = vmatpush1.xpose.msra.mxu0 0.0
    %1724 = vmatprep.subr.mxu0 0.0
    %1725 = vmatpush1.xpose.msra.mxu0 0.0
    %1726 = vmatprep.subr.mxu0 0.0
    %1727 = vmatpush1.xpose.msra.mxu0 0.0
    %1728 = vmatprep.subr.mxu0 0.0
    %1729 = vmatpush1.xpose.msra.mxu0 0.0
    %1730 = vmatprep.subr.mxu0 0.0
    %1731 = vmatpush1.xpose.msra.mxu0 0.0
    %1732 = vmatprep.subr.mxu0 0.0
    %1733 = vmatpush1.xpose.msra.mxu0 0.0
    %1734 = vmatprep.subr.mxu0 0.0
    %1735 = vmatpush1.xpose.msra.mxu0 0.0
    %1736 = vmatprep.subr.mxu0 0.0
    %1737 = vmatpush1.xpose.msra.mxu0 0.0
    %1738 = vmatprep.subr.mxu0 0.0
    %1739 = vmatpush1.xpose.msra.mxu0 0.0
    %1740 = vmatprep.subr.mxu0 0.0
    %1741 = vmatpush1.xpose.msra.mxu0 0.0
    %1742 = vmatprep.subr.mxu0 0.0
    %1743 = vmatpush1.xpose.msra.mxu0 0.0
    %1744 = vmatprep.subr.mxu0 0.0
    %1745 = vmatpush1.xpose.msra.mxu0 0.0
    %1746 = vmatprep.subr.mxu0 0.0
    %1747 = vmatpush1.xpose.msra.mxu0 0.0
    %1748 = vmatprep.subr.mxu0 0.0
    %1749 = vmatpush1.xpose.msra.mxu0 0.0
    %1750 = vmatprep.subr.mxu0 0.0
    %1751 = vmatpush1.xpose.msra.mxu0 0.0
    %1752 = vmatprep.mubr.f32.mxu0 0.0
    %1753 = vmatmul.mubr.f32.gmra.mrb[0].mxu0 %v1680
    %v1754 = vpop.f32.mrb[0].mxu0
    %v1755 = vadd.f32 0.0, %v1754
    %v1756 = vpop.f32.mrb[0].mxu0
    %1757 = vmatprep.mubr.f32.mxu0 0.0
    %1758 = vmatmul.mubr.f32.gmra.mrb[0].mxu0 %v1682
    %v1759 = vpop.f32.mrb[0].mxu0
    %v1760 = vadd.f32 0.0, %v1759
    %v1761 = vpop.f32.mrb[0].mxu0
    %1762 = vdwg.mxu0
    %1763 = vrot.lane.b32.xlu0 %v167, 104
    %v1764 = vpop.permute.xlu0 %1763
    %1765 = vrot.lane.b32.xlu0 %v172, 104
    %v1766 = vpop.permute.xlu0 %1765
    %1767 = vrot.lane.b32.xlu0 %v167, 72
    %v1768 = vpop.permute.xlu0 %1767
    %1769 = vrot.lane.b32.xlu0 %v172, 72
    %v1770 = vpop.permute.xlu0 %1769
    %v1771 = vsel %vm185, %v1764, 0
    %v1773 = vsel %vm185, %v1766, 0
    %v1775 = vsel %vm185, %v1768, 0
    %v1777 = vsel %vm185, %v1770, 0
    %1779 = vmatprep.subr.mxu0 0.0
    %1780 = vmatpush1.xpose.msra.mxu0 %v1775
    %1781 = vmatprep.subr.mxu0 0.0
    %1782 = vmatpush1.xpose.msra.mxu0 %v1777
    %1783 = vmatprep.subr.mxu0 0.0
    %1784 = vmatpush1.xpose.msra.mxu0 0.0
    %1785 = vmatprep.subr.mxu0 0.0
    %1786 = vmatpush1.xpose.msra.mxu0 0.0
    %1787 = vmatprep.subr.mxu0 0.0
    %1788 = vmatpush1.xpose.msra.mxu0 0.0
    %1789 = vmatprep.subr.mxu0 0.0
    %1790 = vmatpush1.xpose.msra.mxu0 0.0
    %1791 = vmatprep.subr.mxu0 0.0
    %1792 = vmatpush1.xpose.msra.mxu0 0.0
    %1793 = vmatprep.subr.mxu0 0.0
    %1794 = vmatpush1.xpose.msra.mxu0 0.0
    %1795 = vmatprep.subr.mxu0 0.0
    %1796 = vmatpush1.xpose.msra.mxu0 0.0
    %1797 = vmatprep.subr.mxu0 0.0
    %1798 = vmatpush1.xpose.msra.mxu0 0.0
    %1799 = vmatprep.subr.mxu0 0.0
    %1800 = vmatpush1.xpose.msra.mxu0 0.0
    %1801 = vmatprep.subr.mxu0 0.0
    %1802 = vmatpush1.xpose.msra.mxu0 0.0
    %1803 = vmatprep.subr.mxu0 0.0
    %1804 = vmatpush1.xpose.msra.mxu0 0.0
    %1805 = vmatprep.subr.mxu0 0.0
    %1806 = vmatpush1.xpose.msra.mxu0 0.0
    %1807 = vmatprep.subr.mxu0 0.0
    %1808 = vmatpush1.xpose.msra.mxu0 0.0
    %1809 = vmatprep.subr.mxu0 0.0
    %1810 = vmatpush1.xpose.msra.mxu0 0.0
    %1811 = vmatprep.subr.mxu0 0.0
    %1812 = vmatpush1.xpose.msra.mxu0 0.0
    %1813 = vmatprep.subr.mxu0 0.0
    %1814 = vmatpush1.xpose.msra.mxu0 0.0
    %1815 = vmatprep.subr.mxu0 0.0
    %1816 = vmatpush1.xpose.msra.mxu0 0.0
    %1817 = vmatprep.subr.mxu0 0.0
    %1818 = vmatpush1.xpose.msra.mxu0 0.0
    %1819 = vmatprep.subr.mxu0 0.0
    %1820 = vmatpush1.xpose.msra.mxu0 0.0
    %1821 = vmatprep.subr.mxu0 0.0
    %1822 = vmatpush1.xpose.msra.mxu0 0.0
    %1823 = vmatprep.subr.mxu0 0.0
    %1824 = vmatpush1.xpose.msra.mxu0 0.0
    %1825 = vmatprep.subr.mxu0 0.0
    %1826 = vmatpush1.xpose.msra.mxu0 0.0
    %1827 = vmatprep.subr.mxu0 0.0
    %1828 = vmatpush1.xpose.msra.mxu0 0.0
    %1829 = vmatprep.subr.mxu0 0.0
    %1830 = vmatpush1.xpose.msra.mxu0 0.0
    %1831 = vmatprep.subr.mxu0 0.0
    %1832 = vmatpush1.xpose.msra.mxu0 0.0
    %1833 = vmatprep.subr.mxu0 0.0
    %1834 = vmatpush1.xpose.msra.mxu0 0.0
    %1835 = vmatprep.subr.mxu0 0.0
    %1836 = vmatpush1.xpose.msra.mxu0 0.0
    %1837 = vmatprep.subr.mxu0 0.0
    %1838 = vmatpush1.xpose.msra.mxu0 0.0
    %1839 = vmatprep.subr.mxu0 0.0
    %1840 = vmatpush1.xpose.msra.mxu0 0.0
    %1841 = vmatprep.subr.mxu0 0.0
    %1842 = vmatpush1.xpose.msra.mxu0 0.0
    %1843 = vmatprep.mubr.f32.mxu0 0.0
    %1844 = vmatmul.mubr.f32.gmra.mrb[0].mxu0 %v1771
    %v1845 = vpop.f32.mrb[0].mxu0
    %v1846 = vadd.f32 0.0, %v1845
    %v1847 = vpop.f32.mrb[0].mxu0
    %1848 = vmatprep.mubr.f32.mxu0 0.0
    %1849 = vmatmul.mubr.f32.gmra.mrb[0].mxu0 %v1773
    %v1850 = vpop.f32.mrb[0].mxu0
    %v1851 = vadd.f32 0.0, %v1850
    %v1852 = vpop.f32.mrb[0].mxu0
    %1853 = vdwg.mxu0
    %v1854 = vsel %vm358, %v1755, -inf
    %1855 = vmax.xlane.f32.xlu0 %v1854
    %v1856 = vpop.xlane.xlu0 %1855
    %v1857 = vsel %vm358, %v1760, -inf
    %1858 = vmax.xlane.f32.xlu0 %v1857
    %v1859 = vpop.xlane.xlu0 %1858
    %v1860 = vsel %vm358, %v1846, -inf
    %1861 = vmax.xlane.f32.xlu0 %v1860
    %v1862 = vpop.xlane.xlu0 %1861
    %v1863 = vsel %vm358, %v1851, -inf
    %1864 = vmax.xlane.f32.xlu0 %v1863
    %v1865 = vpop.xlane.xlu0 %1864
    %v1866 = vsub.f32 %v1755, %v1856
    %v1867 = vsub.f32 %v1760, %v1859
    %v1868 = vsub.f32 %v1846, %v1862
    %v1869 = vsub.f32 %v1851, %v1865
    %v1870 = vmul.f32 %v1866, 1.442695
    %v1871 = vpow.pop %v1870
    %v1872 = vmul.f32 %v1867, 1.442695
    %v1873 = vpow.pop %v1872
    %v1874 = vmul.f32 %v1868, 1.442695
    %v1875 = vpow.pop %v1874
    %v1876 = vmul.f32 %v1869, 1.442695
    %v1877 = vpow.pop %v1876
    %v1878 = vsel %vm358, %v1871, 0.0
    %1879 = vadd.xlane.f32.xlu0 %v1878
    %v1880 = vpop.xlane.xlu0 %1879
    %v1881 = vsel %vm358, %v1873, 0.0
    %1882 = vadd.xlane.f32.xlu0 %v1881
    %v1883 = vpop.xlane.xlu0 %1882
    %v1884 = vsel %vm358, %v1875, 0.0
    %1885 = vadd.xlane.f32.xlu0 %v1884
    %v1886 = vpop.xlane.xlu0 %1885
    %v1887 = vsel %vm358, %v1877, 0.0
    %1888 = vadd.xlane.f32.xlu0 %v1887
    %v1889 = vpop.xlane.xlu0 %1888
    %v1890 = vrcp.pop %v1880
    %v1891 = vmul.f32 %v1871, %v1890
    %v1892 = vrcp.pop %v1883
    %v1893 = vmul.f32 %v1873, %v1892
    %v1894 = vrcp.pop %v1886
    %v1895 = vmul.f32 %v1875, %v1894
    %v1896 = vrcp.pop %v1889
    %v1897 = vmul.f32 %v1877, %v1896
    %1898 = vrot.lane.b32.xlu0 %v157, 40
    %v1899 = vpop.permute.xlu0 %1898
    %1900 = vrot.lane.b32.xlu0 %v162, 40
    %v1901 = vpop.permute.xlu0 %1900
    %v1905 = vsel %vm358, %v1891, 0
    %v1908 = vsel %vm358, %v1893, 0
    %1910 = vmatprep.subr.mxu0 0.0
    %1911 = vmatpush1.msra.mxu0 %v1899
    %1912 = vmatprep.subr.mxu0 0.0
    %1913 = vmatpush1.msra.mxu0 %v1901
    %1914 = vmatprep.subr.mxu0 0.0
    %1915 = vmatpush1.msra.mxu0 0.0
    %1916 = vmatprep.subr.mxu0 0.0
    %1917 = vmatpush1.msra.mxu0 0.0
    %1918 = vmatprep.subr.mxu0 0.0
    %1919 = vmatpush1.msra.mxu0 0.0
    %1920 = vmatprep.subr.mxu0 0.0
    %1921 = vmatpush1.msra.mxu0 0.0
    %1922 = vmatprep.subr.mxu0 0.0
    %1923 = vmatpush1.msra.mxu0 0.0
    %1924 = vmatprep.subr.mxu0 0.0
    %1925 = vmatpush1.msra.mxu0 0.0
    %1926 = vmatprep.subr.mxu0 0.0
    %1927 = vmatpush1.msra.mxu0 0.0
    %1928 = vmatprep.subr.mxu0 0.0
    %1929 = vmatpush1.msra.mxu0 0.0
    %1930 = vmatprep.subr.mxu0 0.0
    %1931 = vmatpush1.msra.mxu0 0.0
    %1932 = vmatprep.subr.mxu0 0.0
    %1933 = vmatpush1.msra.mxu0 0.0
    %1934 = vmatprep.subr.mxu0 0.0
    %1935 = vmatpush1.msra.mxu0 0.0
    %1936 = vmatprep.subr.mxu0 0.0
    %1937 = vmatpush1.msra.mxu0 0.0
    %1938 = vmatprep.subr.mxu0 0.0
    %1939 = vmatpush1.msra.mxu0 0.0
    %1940 = vmatprep.subr.mxu0 0.0
    %1941 = vmatpush1.msra.mxu0 0.0
    %1942 = vmatprep.subr.mxu0 0.0
    %1943 = vmatpush1.msra.mxu0 0.0
    %1944 = vmatprep.subr.mxu0 0.0
    %1945 = vmatpush1.msra.mxu0 0.0
    %1946 = vmatprep.subr.mxu0 0.0
    %1947 = vmatpush1.msra.mxu0 0.0
    %1948 = vmatprep.subr.mxu0 0.0
    %1949 = vmatpush1.msra.mxu0 0.0
    %1950 = vmatprep.subr.mxu0 0.0
    %1951 = vmatpush1.msra.mxu0 0.0
    %1952 = vmatprep.subr.mxu0 0.0
    %1953 = vmatpush1.msra.mxu0 0.0
    %1954 = vmatprep.subr.mxu0 0.0
    %1955 = vmatpush1.msra.mxu0 0.0
    %1956 = vmatprep.subr.mxu0 0.0
    %1957 = vmatpush1.msra.mxu0 0.0
    %1958 = vmatprep.subr.mxu0 0.0
    %1959 = vmatpush1.msra.mxu0 0.0
    %1960 = vmatprep.subr.mxu0 0.0
    %1961 = vmatpush1.msra.mxu0 0.0
    %1962 = vmatprep.subr.mxu0 0.0
    %1963 = vmatpush1.msra.mxu0 0.0
    %1964 = vmatprep.subr.mxu0 0.0
    %1965 = vmatpush1.msra.mxu0 0.0
    %1966 = vmatprep.subr.mxu0 0.0
    %1967 = vmatpush1.msra.mxu0 0.0
    %1968 = vmatprep.subr.mxu0 0.0
    %1969 = vmatpush1.msra.mxu0 0.0
    %1970 = vmatprep.subr.mxu0 0.0
    %1971 = vmatpush1.msra.mxu0 0.0
    %1972 = vmatprep.subr.mxu0 0.0
    %1973 = vmatpush1.msra.mxu0 0.0
    %1974 = vmatprep.mubr.f32.mxu0 0.0
    %1975 = vmatmul.mubr.f32.gmra.mrb[0].mxu0 %v1905
    %v1976 = vpop.f32.mrb[0].mxu0
    %v1977 = vadd.f32 0.0, %v1976
    %v1978 = vpop.f32.mrb[0].mxu0
    %1979 = vmatprep.mubr.f32.mxu0 0.0
    %1980 = vmatmul.mubr.f32.gmra.mrb[0].mxu0 %v1908
    %v1981 = vpop.f32.mrb[0].mxu0
    %v1982 = vadd.f32 0.0, %v1981
    %v1983 = vpop.f32.mrb[0].mxu0
    %1984 = vdwg.mxu0
    %1985 = vrot.lane.b32.xlu0 %v167, 40
    %v1986 = vpop.permute.xlu0 %1985
    %1987 = vrot.lane.b32.xlu0 %v172, 40
    %v1988 = vpop.permute.xlu0 %1987
    %v1992 = vsel %vm358, %v1895, 0
    %v1995 = vsel %vm358, %v1897, 0
    %1997 = vmatprep.subr.mxu0 0.0
    %1998 = vmatpush1.msra.mxu0 %v1986
    %1999 = vmatprep.subr.mxu0 0.0
    %2000 = vmatpush1.msra.mxu0 %v1988
    %2001 = vmatprep.subr.mxu0 0.0
    %2002 = vmatpush1.msra.mxu0 0.0
    %2003 = vmatprep.subr.mxu0 0.0
    %2004 = vmatpush1.msra.mxu0 0.0
    %2005 = vmatprep.subr.mxu0 0.0
    %2006 = vmatpush1.msra.mxu0 0.0
    %2007 = vmatprep.subr.mxu0 0.0
    %2008 = vmatpush1.msra.mxu0 0.0
    %2009 = vmatprep.subr.mxu0 0.0
    %2010 = vmatpush1.msra.mxu0 0.0
    %2011 = vmatprep.subr.mxu0 0.0
    %2012 = vmatpush1.msra.mxu0 0.0
    %2013 = vmatprep.subr.mxu0 0.0
    %2014 = vmatpush1.msra.mxu0 0.0
    %2015 = vmatprep.subr.mxu0 0.0
    %2016 = vmatpush1.msra.mxu0 0.0
    %2017 = vmatprep.subr.mxu0 0.0
    %2018 = vmatpush1.msra.mxu0 0.0
    %2019 = vmatprep.subr.mxu0 0.0
    %2020 = vmatpush1.msra.mxu0 0.0
    %2021 = vmatprep.subr.mxu0 0.0
    %2022 = vmatpush1.msra.mxu0 0.0
    %2023 = vmatprep.subr.mxu0 0.0
    %2024 = vmatpush1.msra.mxu0 0.0
    %2025 = vmatprep.subr.mxu0 0.0
    %2026 = vmatpush1.msra.mxu0 0.0
    %2027 = vmatprep.subr.mxu0 0.0
    %2028 = vmatpush1.msra.mxu0 0.0
    %2029 = vmatprep.subr.mxu0 0.0
    %2030 = vmatpush1.msra.mxu0 0.0
    %2031 = vmatprep.subr.mxu0 0.0
    %2032 = vmatpush1.msra.mxu0 0.0
    %2033 = vmatprep.subr.mxu0 0.0
    %2034 = vmatpush1.msra.mxu0 0.0
    %2035 = vmatprep.subr.mxu0 0.0
    %2036 = vmatpush1.msra.mxu0 0.0
    %2037 = vmatprep.subr.mxu0 0.0
    %2038 = vmatpush1.msra.mxu0 0.0
    %2039 = vmatprep.subr.mxu0 0.0
    %2040 = vmatpush1.msra.mxu0 0.0
    %2041 = vmatprep.subr.mxu0 0.0
    %2042 = vmatpush1.msra.mxu0 0.0
    %2043 = vmatprep.subr.mxu0 0.0
    %2044 = vmatpush1.msra.mxu0 0.0
    %2045 = vmatprep.subr.mxu0 0.0
    %2046 = vmatpush1.msra.mxu0 0.0
    %2047 = vmatprep.subr.mxu0 0.0
    %2048 = vmatpush1.msra.mxu0 0.0
    %2049 = vmatprep.subr.mxu0 0.0
    %2050 = vmatpush1.msra.mxu0 0.0
    %2051 = vmatprep.subr.mxu0 0.0
    %2052 = vmatpush1.msra.mxu0 0.0
    %2053 = vmatprep.subr.mxu0 0.0
    %2054 = vmatpush1.msra.mxu0 0.0
    %2055 = vmatprep.subr.mxu0 0.0
    %2056 = vmatpush1.msra.mxu0 0.0
    %2057 = vmatprep.subr.mxu0 0.0
    %2058 = vmatpush1.msra.mxu0 0.0
    %2059 = vmatprep.subr.mxu0 0.0
    %2060 = vmatpush1.msra.mxu0 0.0
    %2061 = vmatprep.mubr.f32.mxu0 0.0
    %2062 = vmatmul.mubr.f32.gmra.mrb[0].mxu0 %v1992
    %v2063 = vpop.f32.mrb[0].mxu0
    %v2064 = vadd.f32 0.0, %v2063
    %v2065 = vpop.f32.mrb[0].mxu0
    %2066 = vmatprep.mubr.f32.mxu0 0.0
    %2067 = vmatmul.mubr.f32.gmra.mrb[0].mxu0 %v1995
    %v2068 = vpop.f32.mrb[0].mxu0
    %v2069 = vadd.f32 0.0, %v2068
    %v2070 = vpop.f32.mrb[0].mxu0
    %2071 = vdwg.mxu0
    %v2073 = vsel %vm185, %v1977, 0
    %v2076 = vsel %vm185, %v1982, 0
    %v2079 = vsel %vm185, %v2064, 0
    %v2082 = vsel %vm185, %v2069, 0
    %2084 = vmatprep.subr.mxu0 0.0
    %2085 = vmatpush1.msra.mxu0 %v178
    %2086 = vmatprep.subr.mxu0 0.0
    %2087 = vmatpush1.msra.mxu0 0.0
    %2088 = vmatprep.subr.mxu0 0.0
    %2089 = vmatpush1.msra.mxu0 0.0
    %2090 = vmatprep.subr.mxu0 0.0
    %2091 = vmatpush1.msra.mxu0 0.0
    %2092 = vmatprep.subr.mxu0 0.0
    %2093 = vmatpush1.msra.mxu0 0.0
    %2094 = vmatprep.subr.mxu0 0.0
    %2095 = vmatpush1.msra.mxu0 0.0
    %2096 = vmatprep.subr.mxu0 0.0
    %2097 = vmatpush1.msra.mxu0 0.0
    %2098 = vmatprep.subr.mxu0 0.0
    %2099 = vmatpush1.msra.mxu0 0.0
    %2100 = vmatprep.subr.mxu0 0.0
    %2101 = vmatpush1.msra.mxu0 0.0
    %2102 = vmatprep.subr.mxu0 0.0
    %2103 = vmatpush1.msra.mxu0 0.0
    %2104 = vmatprep.subr.mxu0 0.0
    %2105 = vmatpush1.msra.mxu0 0.0
    %2106 = vmatprep.subr.mxu0 0.0
    %2107 = vmatpush1.msra.mxu0 0.0
    %2108 = vmatprep.subr.mxu0 0.0
    %2109 = vmatpush1.msra.mxu0 0.0
    %2110 = vmatprep.subr.mxu0 0.0
    %2111 = vmatpush1.msra.mxu0 0.0
    %2112 = vmatprep.subr.mxu0 0.0
    %2113 = vmatpush1.msra.mxu0 0.0
    %2114 = vmatprep.subr.mxu0 0.0
    %2115 = vmatpush1.msra.mxu0 0.0
    %2116 = vmatprep.subr.mxu0 0.0
    %2117 = vmatpush1.msra.mxu0 0.0
    %2118 = vmatprep.subr.mxu0 0.0
    %2119 = vmatpush1.msra.mxu0 0.0
    %2120 = vmatprep.subr.mxu0 0.0
    %2121 = vmatpush1.msra.mxu0 0.0
    %2122 = vmatprep.subr.mxu0 0.0
    %2123 = vmatpush1.msra.mxu0 0.0
    %2124 = vmatprep.subr.mxu0 0.0
    %2125 = vmatpush1.msra.mxu0 0.0
    %2126 = vmatprep.subr.mxu0 0.0
    %2127 = vmatpush1.msra.mxu0 0.0
    %2128 = vmatprep.subr.mxu0 0.0
    %2129 = vmatpush1.msra.mxu0 0.0
    %2130 = vmatprep.subr.mxu0 0.0
    %2131 = vmatpush1.msra.mxu0 0.0
    %2132 = vmatprep.subr.mxu0 0.0
    %2133 = vmatpush1.msra.mxu0 0.0
    %2134 = vmatprep.subr.mxu0 0.0
    %2135 = vmatpush1.msra.mxu0 0.0
    %2136 = vmatprep.subr.mxu0 0.0
    %2137 = vmatpush1.msra.mxu0 0.0
    %2138 = vmatprep.subr.mxu0 0.0
    %2139 = vmatpush1.msra.mxu0 0.0
    %2140 = vmatprep.subr.mxu0 0.0
    %2141 = vmatpush1.msra.mxu0 0.0
    %2142 = vmatprep.subr.mxu0 0.0
    %2143 = vmatpush1.msra.mxu0 0.0
    %2144 = vmatprep.subr.mxu0 0.0
    %2145 = vmatpush1.msra.mxu0 0.0
    %2146 = vmatprep.subr.mxu0 0.0
    %2147 = vmatpush1.msra.mxu0 0.0
    %2148 = vmatprep.mubr.f32.mxu0 0.0
    %2149 = vmatmul.mubr.f32.gmra.mrb[0].mxu0 %v2073
    %v2150 = vpop.f32.mrb[0].mxu0
    %v2151 = vadd.f32 0.0, %v2150
    %v2152 = vpop.f32.mrb[0].mxu0
    %2153 = vmatprep.mubr.f32.mxu0 0.0
    %2154 = vmatmul.mubr.f32.gmra.mrb[0].mxu0 %v2076
    %v2155 = vpop.f32.mrb[0].mxu0
    %v2156 = vadd.f32 0.0, %v2155
    %v2157 = vpop.f32.mrb[0].mxu0
    %2158 = vmatprep.mubr.f32.mxu0 0.0
    %2159 = vmatmul.mubr.f32.gmra.mrb[0].mxu0 %v2079
    %v2160 = vpop.f32.mrb[0].mxu0
    %v2161 = vadd.f32 0.0, %v2160
    %v2162 = vpop.f32.mrb[0].mxu0
    %2163 = vmatprep.mubr.f32.mxu0 0.0
    %2164 = vmatmul.mubr.f32.gmra.mrb[0].mxu0 %v2082
    %v2165 = vpop.f32.mrb[0].mxu0
    %v2166 = vadd.f32 0.0, %v2165
    %v2167 = vpop.f32.mrb[0].mxu0
    %2168 = vdwg.mxu0
    %v2169 = vadd.f32 %v1668, %v2151
    %v2170 = vadd.f32 %v1669, %v2156
    %v2171 = vadd.f32 %v1670, %v2161
    %v2172 = vadd.f32 %v1671, %v2166
    %v2173 = vld [vmem:[%s4] sm:$0x1]
    %v2175 = vlaneseq
    %v2176 = vshrl.u32 %v2175, 7
    %v2177 = vsub.s32 0, %v2176
    %v2178 = vrot.slane %v2173, %v2177
    %v2180 = vadd.f32 %v2169, %v2178
    %v2181 = vadd.f32 %v2170, %v2178
    %v2182 = vadd.f32 %v2171, %v2178
    %v2183 = vadd.f32 %v2172, %v2178
    %2184 = vst.msk [vmem:[#allocation8] sm:$0xff] %vm77, %v2180
    %2185 = vst.msk [vmem:[#allocation8 + $0x8] sm:$0xff] %vm77, %v2181
    %2186 = vst.msk [vmem:[#allocation8 + $0x10] sm:$0xff] %vm77, %v2182
    %2187 = vst.msk [vmem:[#allocation8 + $0x18] sm:$0xff] %vm77, %v2183
    // Predicated region
    $region34: #{tpu_custom_call.1} parent=1 // pred_check
      _
    $region35: #{tpu_custom_call.1} parent=1 // pred_check_branch
      %2189 = sbr.rel (0) target = $region37
    $region36: #{tpu_custom_call.1} parent=1 // pred_region
      %s2191 = ssub.s32 512, 512
      %2192 = vsyncadd [#allocation4], %s2191
      %s2193 = sshll.u32 [#allocation8], 4
      %s2194 = int_to_ptr.vmem [resolvable:$true] %s2193
      %2199 = dma.vmem_to_hbm [thread:$0]  %s2194, 512, %s5, [#allocation4], 128, 128, 8
    $region37: #{tpu_custom_call.1} parent=1 // pred_fallthru
      _
    // Predicated region
    $region38: #{tpu_custom_call.1} parent=1 // pred_check
      _
    $region39: #{tpu_custom_call.1} parent=1 // pred_check_branch
      %2201 = sbr.rel (0) target = $region41
    $region40: #{tpu_custom_call.1} parent=1 // pred_region
      %2202 = dma.done [#allocation4], 512
    $region41: #{tpu_custom_call.1} parent=1 // pred_fallthru
      _
    %2203 = vsyncpa [#allocation3], 1
    %2204 = vsyncpa [#allocation6], 1
    %2205 = vsyncpa [#allocation4], 1

</llo_original>
